<compile_context>
chip_gen: v7x
topology: tpu7x:2x2x1
jax: 0.10.0
libtpu: 0.0.40
codegen_flags: <defaults>
</compile_context>

<pallas_src>
import functools
import math

import jax
import jax.numpy as jnp
from jax.experimental import pallas as pl
from jax.experimental.pallas import tpu as pltpu


def _round_up(x, m):
    return (x + m - 1) // m * m


def _vmem_limit_bytes():
    # ~3/4 of physical VMEM: ~96 MiB on 128-MiB v5e/v6e, ~48 MiB on 64-MiB v7x.
    try:
        cap = pltpu.get_tpu_info().vmem_capacity_bytes
        return int(min(cap * 3 // 4, 96 * 1024 * 1024))
    except Exception:
        return 32 * 1024 * 1024


_VMEM_LIMIT = _vmem_limit_bytes()


def _pick_tiling(M):
    """Row tile for the M-tiled kernels.  Prefers divisors of M (no host-side
    padding), multiples of 16 (bf16 min sublane tile), >= 2 grid steps (so the
    second TensorCore on v7x is used), capped at 512 (v7x VMEM budget)."""
    for c in (512, 256, 128, 64, 32, 16):
        if M % c == 0 and M // c >= 2:
            return c, M
    if M <= 512:
        Mp = _round_up(max(M, 16), 16)
        return Mp, Mp  # single-tile fallback for tiny / awkward M
    tm = 256
    return tm, _round_up(M, tm)


# -----------------------------------------------------------------------------
# Kernel 1: fused QKV projection  x @ [scale*Wq^T | Wk^T | Wv^T] + b   (bf16 MXU)
# -----------------------------------------------------------------------------
def _qkv_kernel(x_ref, w_ref, b_ref, o_ref):
    x = x_ref[...].astype(jnp.bfloat16)
    acc = jnp.dot(x, w_ref[...], preferred_element_type=jnp.float32)
    o_ref[...] = (acc + b_ref[...]).astype(o_ref.dtype)


def _qkv_pallas(x, w_qkv, b_qkv, *, tm):
    Mp, H = x.shape
    N = w_qkv.shape[1]
    return pl.pallas_call(
        _qkv_kernel,
        out_shape=jax.ShapeDtypeStruct((Mp, N), jnp.bfloat16),
        grid=(Mp // tm,),
        in_specs=[
            pl.BlockSpec((tm, H), lambda i: (i, 0)),   # activations (tiled over M)
            pl.BlockSpec((H, N), lambda i: (0, 0)),    # fused QKV weight (resident, bf16)
            pl.BlockSpec((1, N), lambda i: (0, 0)),    # fused QKV bias (f32)
        ],
        out_specs=pl.BlockSpec((tm, N), lambda i: (i, 0)),
        compiler_params=pltpu.CompilerParams(
            dimension_semantics=("parallel",),
            vmem_limit_bytes=_VMEM_LIMIT,
        ),
    )(x, w_qkv, b_qkv)


# -----------------------------------------------------------------------------
# Kernel 2: attention core, per (batch, head-group).  Reads Q/K/V straight out
# of the flat (M, 3H) QKV buffer, writes straight into the flat (M, H) context
# buffer (lane-dense blocks, no host-side transposes).
# -----------------------------------------------------------------------------
def _attention_kernel(q_ref, k_ref, v_ref, m_ref, o_ref, *, heads, head_dim):
    q = q_ref[...]                       # (S, G*d) bf16; 1/sqrt(d) folded into Wq
    k = k_ref[...]                       # (S, G*d) bf16
    v = v_ref[...]                       # (S, G*d) bf16
    mask = m_ref[...]                    # (1, S) additive mask, broadcast over rows
    outs = []
    for h in range(heads):               # static unrolled loop over heads in group
        sl = slice(h * head_dim, (h + 1) * head_dim)
        s = jax.lax.dot_general(
            q[:, sl], k[:, sl], (((1,), (1,)), ((), ())),
            preferred_element_type=jnp.float32)
        s = s + mask
        s = s - jnp.max(s, axis=-1, keepdims=True)
        p = jnp.exp(s)
        inv_l = pl.reciprocal(jnp.sum(p, axis=-1, keepdims=True), approx=True)
        ctx = jnp.dot(p.astype(v.dtype), v[:, sl],
                      preferred_element_type=jnp.float32)
        outs.append(ctx * inv_l)         # normalize the (S, d) result, not (S, S)
    # TODO(synk): attention-prob dropout and head_mask are identity / unused here.
    o_ref[...] = jnp.concatenate(outs, axis=-1).astype(o_ref.dtype)


def _attention_pallas(qkv, mask3, *, B, S, H, G, d):
    M = B * S
    Gd = G * d
    ng = H // Gd                          # number of head groups
    kern = functools.partial(_attention_kernel, heads=G, head_dim=d)
    blk = (S, Gd)
    return pl.pallas_call(
        kern,
        out_shape=jax.ShapeDtypeStruct((M, H), jnp.bfloat16),
        grid=(B, ng),
        in_specs=[
            pl.BlockSpec(blk, lambda b, g: (b, g)),            # Q columns
            pl.BlockSpec(blk, lambda b, g: (b, ng + g)),       # K columns
            pl.BlockSpec(blk, lambda b, g: (b, 2 * ng + g)),   # V columns
            pl.BlockSpec((pl.Squeezed(), 1, S), lambda b, g: (b, 0, 0)),  # mask
        ],
        out_specs=pl.BlockSpec(blk, lambda b, g: (b, g)),
        compiler_params=pltpu.CompilerParams(
            dimension_semantics=("parallel", "parallel"),
            vmem_limit_bytes=_VMEM_LIMIT,
        ),
    )(qkv, qkv, qkv, mask3)


# -----------------------------------------------------------------------------
# Kernel 3: BertSelfOutput  (dense + residual + LayerNorm), tiled over M
# -----------------------------------------------------------------------------
def _self_output_kernel(ctx_ref, res_ref, w_ref, b_ref, g_ref, beta_ref, o_ref, *, eps):
    h = jnp.dot(ctx_ref[...], w_ref[...], preferred_element_type=jnp.float32)
    # TODO(synk): hidden dropout is identity at inference.
    h = h + b_ref[...] + res_ref[...]
    mean = jnp.mean(h, axis=-1, keepdims=True)
    c = h - mean
    var = jnp.mean(c * c, axis=-1, keepdims=True)
    o_ref[...] = (c * jax.lax.rsqrt(var + eps) * g_ref[...] + beta_ref[...]).astype(
        o_ref.dtype)


def _self_output_pallas(ctx, residual, w_t, b, gamma, beta, *, eps, tm):
    Mp, H = ctx.shape
    kern = functools.partial(_self_output_kernel, eps=eps)
    return pl.pallas_call(
        kern,
        out_shape=jax.ShapeDtypeStruct((Mp, H), jnp.float32),
        grid=(Mp // tm,),
        in_specs=[
            pl.BlockSpec((tm, H), lambda i: (i, 0)),   # attention context (bf16)
            pl.BlockSpec((tm, H), lambda i: (i, 0)),   # residual (layer input, f32)
            pl.BlockSpec((H, H), lambda i: (0, 0)),    # dense weight (resident, bf16)
            pl.BlockSpec((1, H), lambda i: (0, 0)),    # dense bias
            pl.BlockSpec((1, H), lambda i: (0, 0)),    # LN gamma
            pl.BlockSpec((1, H), lambda i: (0, 0)),    # LN beta
        ],
        out_specs=pl.BlockSpec((tm, H), lambda i: (i, 0)),
        compiler_params=pltpu.CompilerParams(
            dimension_semantics=("parallel",),
            vmem_limit_bytes=_VMEM_LIMIT,
        ),
    )(ctx, residual, w_t, b, gamma, beta)


# -----------------------------------------------------------------------------
# Kernel 4: BertIntermediate + BertOutput fused
#           (dense H->I, exact erf GELU, dense I->H, residual, LayerNorm)
# -----------------------------------------------------------------------------
def _ffn_kernel(x_ref, wi_ref, bi_ref, wo_ref, bo_ref, g_ref, beta_ref, o_ref, *, eps):
    x = x_ref[...]                                            # (tm, H) f32 residual
    h = jnp.dot(x.astype(jnp.bfloat16), wi_ref[...],
                preferred_element_type=jnp.float32) + bi_ref[...]
    # exact GELU: x * 0.5 * (1 + erf(x / sqrt(2)))  (matches ACT2FN['gelu'])
    h = h * 0.5 * (1.0 + jax.lax.erf(h * (1.0 / math.sqrt(2.0))))
    y = jnp.dot(h.astype(jnp.bfloat16), wo_ref[...],
                preferred_element_type=jnp.float32) + bo_ref[...]
    # TODO(synk): hidden dropout is identity at inference.
    y = y + x
    mean = jnp.mean(y, axis=-1, keepdims=True)
    c = y - mean
    var = jnp.mean(c * c, axis=-1, keepdims=True)
    o_ref[...] = (c * jax.lax.rsqrt(var + eps) * g_ref[...] + beta_ref[...]).astype(
        o_ref.dtype)


def _ffn_pallas(x, wi_t, bi, wo_t, bo, gamma, beta, *, eps, tm):
    Mp, H = x.shape
    I = wi_t.shape[1]
    kern = functools.partial(_ffn_kernel, eps=eps)
    # TODO(synk): for very large I on v7x, tile I with an in-kernel accumulation
    # loop instead of keeping both bf16 FFN weights fully resident.
    return pl.pallas_call(
        kern,
        out_shape=jax.ShapeDtypeStruct((Mp, H), jnp.float32),
        grid=(Mp // tm,),
        in_specs=[
            pl.BlockSpec((tm, H), lambda i: (i, 0)),   # attention output (tiled, f32)
            pl.BlockSpec((H, I), lambda i: (0, 0)),    # intermediate weight (bf16)
            pl.BlockSpec((1, I), lambda i: (0, 0)),    # intermediate bias
            pl.BlockSpec((I, H), lambda i: (0, 0)),    # output weight (bf16)
            pl.BlockSpec((1, H), lambda i: (0, 0)),    # output bias
            pl.BlockSpec((1, H), lambda i: (0, 0)),    # LN gamma
            pl.BlockSpec((1, H), lambda i: (0, 0)),    # LN beta
        ],
        out_specs=pl.BlockSpec((tm, H), lambda i: (i, 0)),
        compiler_params=pltpu.CompilerParams(
            dimension_semantics=("parallel",),
            vmem_limit_bytes=_VMEM_LIMIT,
        ),
    )(x, wi_t, bi, wo_t, bo, gamma, beta)


# -----------------------------------------------------------------------------
# Full BertLayer forward
# -----------------------------------------------------------------------------
def bert_layer_forward(hidden_states, attention_mask, params, *, num_heads,
                       eps=1e-12, tm=None):
    """attention_mask: additive key-padding mask of shape (B, S)
    (0 keep, large-negative mask) or None."""
    B, S, H = hidden_states.shape
    NH = num_heads
    d = H // NH
    I = params["wi"].shape[0]
    M = B * S
    if tm is None:
        tm, Mp = _pick_tiling(M)
    else:
        Mp = _round_up(M, tm)

    bf = jnp.bfloat16
    f32 = jnp.float32
    x2d = hidden_states.reshape(M, H).astype(f32)
    x2d_p = x2d if Mp == M else jnp.pad(x2d, ((0, Mp - M), (0, 0)))

    # --- fused QKV projection; 1/sqrt(d) folded into Wq / bq (exact) ------------
    scale = 1.0 / math.sqrt(d)
    w_qkv = jnp.concatenate(
        [params["wq"].T * scale, params["wk"].T, params["wv"].T], axis=1
    ).astype(bf)                                               # (H, 3H) bf16
    b_qkv = jnp.concatenate(
        [params["bq"] * scale, params["bk"], params["bv"]]
    ).reshape(1, 3 * H).astype(f32)

    qkv_p = _qkv_pallas(x2d_p, w_qkv, b_qkv, tm=tm)            # (Mp, 3H) bf16
    qkv = qkv_p if Mp == M else qkv_p[:M]

    # --- head grouping so the attention block width is a multiple of 128 -------
    G = NH
    for g in range(1, NH + 1):
        if NH % g == 0 and (g * d) % 128 == 0:
            G = g
            break
    # TODO(synk): if neither any head-group width nor H is a multiple of 128,
    # this flat layout does not lower; a per-head fallback kernel would be needed.

    if attention_mask is None:
        mask3 = jnp.zeros((B, 1, S), f32)
    else:
        mask3 = attention_mask.reshape(B, 1, S).astype(f32)

    # --- attention core (writes directly into the flat (M, H) context buffer) --
    ctx = _attention_pallas(qkv, mask3, B=B, S=S, H=H, G=G, d=d)   # (M, H) bf16
    ctx_p = ctx if Mp == M else jnp.pad(ctx, ((0, Mp - M), (0, 0)))

    # --- BertSelfOutput: dense + residual + LayerNorm ---------------------------
    attn_out_p = _self_output_pallas(
        ctx_p, x2d_p,
        params["wo_attn"].T.astype(bf),
        params["bo_attn"].reshape(1, H).astype(f32),
        params["ln1_g"].reshape(1, H).astype(f32),
        params["ln1_b"].reshape(1, H).astype(f32),
        eps=eps, tm=tm,
    )

    # --- BertIntermediate + BertOutput (fused FFN) ------------------------------
    layer_out_p = _ffn_pallas(
        attn_out_p,
        params["wi"].T.astype(bf), params["bi"].reshape(1, I).astype(f32),
        params["wo_ffn"].T.astype(bf), params["bo_ffn"].reshape(1, H).astype(f32),
        params["ln2_g"].reshape(1, H).astype(f32),
        params["ln2_b"].reshape(1, H).astype(f32),
        eps=eps, tm=tm,
    )
    layer_out = layer_out_p if Mp == M else layer_out_p[:M]
    return layer_out.reshape(B, S, H)


# -----------------------------------------------------------------------------
# Pure-JAX f32 reference (sanity check only)
# -----------------------------------------------------------------------------
def _reference(x, mask_add, params, *, num_heads, eps=1e-12):
    B, S, H = x.shape
    d = H // num_heads

    def lin(t, wt, bt):
        return t @ wt.T + bt

    def split_heads(t):
        return t.reshape(B, S, num_heads, d).transpose(0, 2, 1, 3)

    def ln(t, g, b):
        mu = jnp.mean(t, -1, keepdims=True)
        var = jnp.mean((t - mu) ** 2, -1, keepdims=True)
        return (t - mu) * jax.lax.rsqrt(var + eps) * g + b

    q = split_heads(lin(x, params["wq"], params["bq"]))
    k = split_heads(lin(x, params["wk"], params["bk"]))
    v = split_heads(lin(x, params["wv"], params["bv"]))
    s = jnp.einsum("bhqd,bhkd->bhqk", q, k) / math.sqrt(d)
    if mask_add is not None:
        s = s + mask_add[:, None, None, :]
    p = jax.nn.softmax(s, axis=-1)
    ctx = jnp.einsum("bhqk,bhkd->bhqd", p, v).transpose(0, 2, 1, 3).reshape(B, S, H)
    attn = ln(lin(ctx, params["wo_attn"], params["bo_attn"]) + x,
              params["ln1_g"], params["ln1_b"])
    h = lin(attn, params["wi"], params["bi"])
    h = h * 0.5 * (1.0 + jax.lax.erf(h / math.sqrt(2.0)))
    return ln(lin(h, params["wo_ffn"], params["bo_ffn"]) + attn,
              params["ln2_g"], params["ln2_b"])


if __name__ == "__main__":
    # Small BERT-ish config: batch=2, seq=128, hidden=256, heads=4 (d=64),
    # intermediate=1024.
    B, S, H, NH, I = 2, 128, 256, 4, 1024
    key = jax.random.PRNGKey(0)
    ks = jax.random.split(key, 14)

    def w(k, shape, scale=0.02):
        return scale * jax.random.normal(k, shape, dtype=jnp.float32)

    params = {
        "wq": w(ks[0], (H, H)), "bq": w(ks[1], (H,), 0.01),
        "wk": w(ks[2], (H, H)), "bk": w(ks[3], (H,), 0.01),
        "wv": w(ks[4], (H, H)), "bv": w(ks[5], (H,), 0.01),
        "wo_attn": w(ks[6], (H, H)), "bo_attn": w(ks[7], (H,), 0.01),
        "ln1_g": jnp.ones((H,), jnp.float32), "ln1_b": jnp.zeros((H,), jnp.float32),
        "wi": w(ks[8], (I, H)), "bi": w(ks[9], (I,), 0.01),
        "wo_ffn": w(ks[10], (H, I)), "bo_ffn": w(ks[11], (H,), 0.01),
        "ln2_g": jnp.ones((H,), jnp.float32), "ln2_b": jnp.zeros((H,), jnp.float32),
    }

    hidden_states = jax.random.normal(ks[12], (B, S, H), dtype=jnp.float32)

    # BERT-style additive padding mask: sequence 1 has its last 16 tokens masked.
    lengths = jnp.array([S, S - 16])
    keep = (jnp.arange(S)[None, :] < lengths[:, None]).astype(jnp.float32)
    mask_add = (1.0 - keep) * -10000.0  # (B, S), 0 keep / -1e4 mask

    out = bert_layer_forward(hidden_states, mask_add, params, num_heads=NH)
    out = jax.block_until_ready(out)

    ref = _reference(hidden_states, mask_add, params, num_heads=NH)
    assert out.shape == (B, S, H)
    max_err = float(jnp.max(jnp.abs(out - ref)))
    # bf16 matmuls with f32 accumulation -> looser tolerance than pure f32.
    assert jnp.allclose(out, ref, atol=3e-2, rtol=3e-2), (
        f"mismatch vs reference, max abs err {max_err}"
    )

    print("KERNEL_OK")
</pallas_src>

<mosaic_0001>
module attributes {stable_mosaic.version = 11 : i64} {
  func.func @_qkv_kernel(%arg0: i32, %arg1: memref<128x256xf32, #tpu.memory_space<vmem>>, %arg2: memref<256x768xbf16, #tpu.memory_space<vmem>>, %arg3: memref<1x768xf32, #tpu.memory_space<vmem>>, %arg4: memref<128x768xbf16, #tpu.memory_space<vmem>>) attributes {dimension_semantics = [#tpu.dimension_semantics<parallel>], iteration_bounds = array<i64: 2>, scalar_prefetch = 0 : i64, scratch_operands = 0 : i64, tpu.core_type = #tpu.core_type<tc>, window_params = [{transform_indices = @transform_0, window_bounds = array<i64: 128, 256>}, {pipeline_mode = #tpu.pipeline_mode<synchronous>, transform_indices = @transform_1, window_bounds = array<i64: 256, 768>}, {pipeline_mode = #tpu.pipeline_mode<synchronous>, transform_indices = @transform_2, window_bounds = array<i64: 1, 768>}, {transform_indices = @transform_3, window_bounds = array<i64: 128, 768>}]} {
    %c0 = arith.constant 0 : index
    %c0_0 = arith.constant 0 : index
    %0 = vector.load %arg1[%c0, %c0_0] : memref<128x256xf32, #tpu.memory_space<vmem>>, vector<128x256xf32>
    %1 = arith.truncf %0 : vector<128x256xf32> to vector<128x256xbf16>
    %c0_1 = arith.constant 0 : index
    %c0_2 = arith.constant 0 : index
    %2 = vector.load %arg2[%c0_1, %c0_2] : memref<256x768xbf16, #tpu.memory_space<vmem>>, vector<256x768xbf16>
    %cst = arith.constant dense<0.000000e+00> : vector<128x768xf32>
    %3 = tpu.matmul %1, %2, %cst {dimension_numbers = #tpu.dot_dimension_numbers<[1], [0], [0], [1], [0, 0, 1, 1], [], []>} : vector<128x256xbf16>, vector<256x768xbf16>, vector<128x768xf32> -> vector<128x768xf32>
    %c0_3 = arith.constant 0 : index
    %c0_4 = arith.constant 0 : index
    %4 = vector.load %arg3[%c0_3, %c0_4] : memref<1x768xf32, #tpu.memory_space<vmem>>, vector<1x768xf32>
    %5 = vector.broadcast %4 : vector<1x768xf32> to vector<128x768xf32>
    %6 = arith.addf %3, %5 : vector<128x768xf32>
    %7 = arith.truncf %6 : vector<128x768xf32> to vector<128x768xbf16>
    %c0_5 = arith.constant 0 : index
    %c0_6 = arith.constant 0 : index
    %8 = vector.load %arg4[%c0_5, %c0_6] : memref<128x768xbf16, #tpu.memory_space<vmem>>, vector<128x768xbf16>
    tpu.vector_store %arg4[%c0_5, %c0_6], %7 {strides = array<i32>} : memref<128x768xbf16, #tpu.memory_space<vmem>>, vector<128x768xbf16>,
    return
  }
  func.func @transform_0(%arg0: i32) -> (i32, i32) {
    %c0_i32 = arith.constant 0 : i32
    %c0_i32_0 = arith.constant 0 : i32
    return %arg0, %c0_i32 : i32, i32
  }
  func.func @transform_1(%arg0: i32) -> (i32, i32) {
    %c0_i32 = arith.constant 0 : i32
    %c0_i32_0 = arith.constant 0 : i32
    %c0_i32_1 = arith.constant 0 : i32
    return %c0_i32, %c0_i32_0 : i32, i32
  }
  func.func @transform_2(%arg0: i32) -> (i32, i32) {
    %c0_i32 = arith.constant 0 : i32
    %c0_i32_0 = arith.constant 0 : i32
    %c0_i32_1 = arith.constant 0 : i32
    return %c0_i32, %c0_i32_0 : i32, i32
  }
  func.func @transform_3(%arg0: i32) -> (i32, i32) {
    %c0_i32 = arith.constant 0 : i32
    %c0_i32_0 = arith.constant 0 : i32
    return %arg0, %c0_i32 : i32, i32
  }
}

</mosaic_0001>

<llo_original>
// kernel: tpu_custom_call.1
$region0: #{tpu_custom_call.1}
  #allocation0 [shape = 'u32[]', space=smem, size = 0x4, offset = 0x4, fixed_abs, tag = 'smem constant byte address 0x4 - core index']
  #allocation1 [shape = 'u32[144,128]{1,0:T(1,128)}', space=vmem, size = 0x12000, scoped, tag = 'internal scratch']
  %s0 = inlined_call_operand.hbm [shape: f32[256,256], index: 0, kind: input, shape index: {}]
  %s1 = inlined_call_operand.hbm [shape: bf16[256,768], index: 1, kind: input, shape index: {}]
  %s2 = inlined_call_operand.vmem [shape: f32[1,768], index: 2, kind: input, shape index: {}]
  %s3 = inlined_call_operand.hbm [shape: bf16[256,768], index: 3, kind: output, shape index: {}]
  %s4 = sld [smem:[#allocation0]]
  $region53: #{tpu_custom_call.1} parent=0
    _
  %s6 = ssub.s32 1, %s4
  %s7 = scalar_select 0, %s6, %s4
  $region1: #{tpu_custom_call.1} parent=0
    #allocation2 [shape = 'u8[262144]{0}', space=vmem, size = 0x40000, scoped, tag = 'input window, operand 0']
    #allocation3 [shape = 's32[2]{0}', space=sflag, size = 0x8, scoped, tag = 'scoped memory for tpu_custom_call.1']
    #allocation4 [shape = 's32[2]{0}', space=sflag, size = 0x8, scoped, tag = 'scoped memory for tpu_custom_call.1']
    #allocation5 [shape = 'u8[393216]{0}', space=vmem, size = 0x60000, scoped, tag = 'input window, operand 1, single buffered']
    #allocation6 [shape = 's32[1]{0}', space=sflag, size = 0x4, scoped, tag = 'scoped memory for tpu_custom_call.1']
    #allocation7 [shape = 'u8[393216]{0}', space=vmem, size = 0x60000, scoped, tag = 'output window, operand 0']
    %8 = vsyncpa [#allocation3], 0
    %s9 = scalar_lea.sflag [#allocation3], 1
    %10 = vsyncpa %s9, 0
    %11 = vsyncpa [#allocation6], 0
    %12 = vsyncpa [#allocation4], 0
    %s13 = scalar_lea.sflag [#allocation4], 1
    %14 = vsyncpa %s13, 0
    loop: start=0, step=1, limit=4
    $region2: #{tpu_custom_call.1} parent=1 // loop_pre_header
      _
    $region3: #{tpu_custom_call.1} parent=1 // loop_header
      %s16 = sphi 0, %s20
      %p17 = scmp.ge.s32.totalorder %s16, 4
      %s26 = sphi 0, %s28
      %s29 = sphi 0, %s26
      %s30 = sphi 0, %s29
      %s46 = sphi 0, %s30
      %s50 = sphi 0, %s50
      %s52 = sphi 0, %s50
      %s53 = sphi 0, %s52
      %s67 = sphi 0, %s53
      %s71 = sphi 0, %s71
      %s73 = sphi 0, %s71
      %s74 = sphi 0, %s73
      %s88 = sphi 0, %s74
      %s94 = sphi 0, %s96
      %s97 = sphi 0, %s94
      %s98 = sphi 0, %s97
      %s114 = sphi 0, %s98
    $region4: #{tpu_custom_call.1} parent=1 // loop_header_branch
      %19 = sbr.rel (%p17) target = $region8
    $region5: #{tpu_custom_call.1} parent=1 // loop_body
      %s21 = ssub.s32 %s16, 1
      %s22 = ssub.s32 %s16, 2
      %s23 = sadd.s32 %s16, 1
      %s24 = ssub.s32 %s16, %s23
      %p25 = scmp.eq.s32.totalorder %s24, 0
      %s27 = sadd.s32 %s26, 1
      %s28 = scalar_select %p25, %s26, %s27
      %p31 = pneg %p25
      %p32 = scmp.eq.s32.totalorder %s16, 1
      %p33 = por %p31, %p32
      %p34 = scmp.ne.s32.totalorder %s26, %s29
      %p35 = scmp.eq.s32.totalorder %s16, 0
      %p36 = por %p34, %p35
      %p37 = scmp.ne.s32.totalorder %s26, %s29
      %p38 = scmp.eq.s32.totalorder %s21, 1
      %p39 = por %p37, %p38
      %p40 = scmp.ne.s32.totalorder %s29, %s30
      %p41 = scmp.eq.s32.totalorder %s21, 0
      %p42 = por %p40, %p41
      %p43 = scmp.ne.s32.totalorder %s29, %s30
      %p44 = scmp.eq.s32.totalorder %s22, 1
      %p45 = por %p43, %p44
      %p47 = scmp.ne.s32.totalorder %s30, %s46
      %p48 = scmp.eq.s32.totalorder %s22, 0
      %p49 = por %p47, %p48
      %s51 = sadd.s32 %s50, 1
      %p54 = scmp.eq.s32.totalorder %s16, 1
      %p55 = scmp.ne.s32.totalorder %s50, %s52
      %p56 = scmp.eq.s32.totalorder %s16, 0
      %p57 = por %p55, %p56
      %p58 = scmp.ne.s32.totalorder %s50, %s52
      %p59 = scmp.eq.s32.totalorder %s21, 1
      %p60 = por %p58, %p59
      %p61 = scmp.ne.s32.totalorder %s52, %s53
      %p62 = scmp.eq.s32.totalorder %s21, 0
      %p63 = por %p61, %p62
      %p64 = scmp.ne.s32.totalorder %s52, %s53
      %p65 = scmp.eq.s32.totalorder %s22, 1
      %p66 = por %p64, %p65
      %p68 = scmp.ne.s32.totalorder %s53, %s67
      %p69 = scmp.eq.s32.totalorder %s22, 0
      %p70 = por %p68, %p69
      %s72 = sadd.s32 %s71, 1
      %p75 = scmp.eq.s32.totalorder %s16, 1
      %p76 = scmp.ne.s32.totalorder %s71, %s73
      %p77 = scmp.eq.s32.totalorder %s16, 0
      %p78 = por %p76, %p77
      %p79 = scmp.ne.s32.totalorder %s71, %s73
      %p80 = scmp.eq.s32.totalorder %s21, 1
      %p81 = por %p79, %p80
      %p82 = scmp.ne.s32.totalorder %s73, %s74
      %p83 = scmp.eq.s32.totalorder %s21, 0
      %p84 = por %p82, %p83
      %p85 = scmp.ne.s32.totalorder %s73, %s74
      %p86 = scmp.eq.s32.totalorder %s22, 1
      %p87 = por %p85, %p86
      %p89 = scmp.ne.s32.totalorder %s74, %s88
      %p90 = scmp.eq.s32.totalorder %s22, 0
      %p91 = por %p89, %p90
      %s92 = ssub.s32 %s16, %s23
      %p93 = scmp.eq.s32.totalorder %s92, 0
      %s95 = sadd.s32 %s94, 1
      %s96 = scalar_select %p93, %s94, %s95
      %p99 = pneg %p93
      %p100 = scmp.eq.s32.totalorder %s16, 1
      %p101 = por %p99, %p100
      %p102 = scmp.ne.s32.totalorder %s94, %s97
      %p103 = scmp.eq.s32.totalorder %s16, 0
      %p104 = por %p102, %p103
      %p105 = scmp.ne.s32.totalorder %s94, %s97
      %p106 = scmp.eq.s32.totalorder %s21, 1
      %p107 = por %p105, %p106
      %p108 = scmp.ne.s32.totalorder %s97, %s98
      %p109 = scmp.eq.s32.totalorder %s21, 0
      %p110 = por %p108, %p109
      %p111 = scmp.ne.s32.totalorder %s97, %s98
      %p112 = scmp.eq.s32.totalorder %s22, 1
      %p113 = por %p111, %p112
      %p115 = scmp.ne.s32.totalorder %s98, %s114
      %p116 = scmp.eq.s32.totalorder %s22, 0
      %p117 = por %p115, %p116
      %p118 = scmp.le.s32.totalorder 1, %s16
      %p119 = scmp.lt.s32.totalorder %s16, 3
      %p120 = pnand %p118, %p119
      %p121 = pneg %p120
      // Predicated region
      $region9: #{tpu_custom_call.1} parent=5 // pred_check
        _
      $region10: #{tpu_custom_call.1} parent=5 // pred_check_branch
        %123 = sbr.rel (%p120) target = $region12
      $region11: #{tpu_custom_call.1} parent=5 // pred_region
        %s124 = ssub.s32 %s16, 1
        // Predicated region
        $region13: #{tpu_custom_call.1} parent=11 // pred_check
          %p125 = pneg %p63
        $region14: #{tpu_custom_call.1} parent=11 // pred_check_branch
          %127 = sbr.rel (%p125) target = $region16
        $region15: #{tpu_custom_call.1} parent=11 // pred_region
          %s129 = ssub.s32 12288, 12288
          %130 = vsyncadd [#allocation6], %s129
          %s131 = sshll.u32 [#allocation5], 4
          %s132 = int_to_ptr.vmem [resolvable:$true] %s131
          %137 = dma.hbm_to_vmem [thread:$0]  %s1, 12288, %s132, [#allocation6], 384, 384, 24
        $region16: #{tpu_custom_call.1} parent=11 // pred_fallthru
          _
        // Predicated region
        $region17: #{tpu_custom_call.1} parent=11 // pred_check
          %p138 = pneg %p84
        $region18: #{tpu_custom_call.1} parent=11 // pred_check_branch
          %140 = sbr.rel (%p138) target = $region20
        $region19: #{tpu_custom_call.1} parent=11 // pred_region
          _
        $region20: #{tpu_custom_call.1} parent=11 // pred_fallthru
          _
      $region12: #{tpu_custom_call.1} parent=5 // pred_fallthru
        _
      %p141 = scmp.lt.s32.totalorder %s16, 2
      // Predicated region
      $region21: #{tpu_custom_call.1} parent=5 // pred_check
        %p142 = pneg %p141
      $region22: #{tpu_custom_call.1} parent=5 // pred_check_branch
        %144 = sbr.rel (%p142) target = $region24
      $region23: #{tpu_custom_call.1} parent=5 // pred_region
        // Predicated region
        $region25: #{tpu_custom_call.1} parent=23 // pred_check
          %p145 = pneg %p36
        $region26: #{tpu_custom_call.1} parent=23 // pred_check_branch
          %147 = sbr.rel (%p145) target = $region28
        $region27: #{tpu_custom_call.1} parent=23 // pred_region
          %s148 = sand.u32 %s26, 1
          %s149 = scalar_lea.sflag [#allocation3], %s148
          %s150 = sand.u32 %s26, 1
          %s151 = smul.addr %s150, 256
          %s152 = scalar_lea.vmem [#allocation2], %s151
          %s153 = smul.u32 16, %s16
          %s155 = ssub.s32 4096, 4096
          %156 = vsyncadd %s149, %s155
          %s157 = smul.addr %s153, 2
          %s158 = smul.addr %s157, 128
          %s159 = scalar_lea.hbm %s0, %s158
          %s160 = sshll.u32 %s152, 4
          %s161 = int_to_ptr.vmem [resolvable:$true] %s160
          %166 = dma.hbm_to_vmem [thread:$0]  %s159, 4096, %s161, %s149, 256, 256, 16
        $region28: #{tpu_custom_call.1} parent=23 // pred_fallthru
          _
      $region24: #{tpu_custom_call.1} parent=5 // pred_fallthru
        _
      %p167 = scmp.le.s32.totalorder 1, %s16
      %p168 = scmp.lt.s32.totalorder %s16, 3
      %p169 = pnand %p167, %p168
      %p170 = pneg %p169
      // Predicated region
      $region29: #{tpu_custom_call.1} parent=5 // pred_check
        _
      $region30: #{tpu_custom_call.1} parent=5 // pred_check_branch
        %172 = sbr.rel (%p169) target = $region32
      $region31: #{tpu_custom_call.1} parent=5 // pred_region
        %s173 = ssub.s32 %s16, 1
        %s174 = sand.u32 %s29, 1
        %s175 = scalar_lea.sflag [#allocation3], %s174
        %s176 = sand.u32 %s29, 1
        %s177 = smul.addr %s176, 256
        %s178 = scalar_lea.vmem [#allocation2], %s177
        // Predicated region
        $region33: #{tpu_custom_call.1} parent=31 // pred_check
          %p179 = pneg %p42
        $region34: #{tpu_custom_call.1} parent=31 // pred_check_branch
          %181 = sbr.rel (%p179) target = $region36
        $region35: #{tpu_custom_call.1} parent=31 // pred_region
          %182 = dma.done %s175, 4096
        $region36: #{tpu_custom_call.1} parent=31 // pred_fallthru
          _
        // Predicated region
        $region37: #{tpu_custom_call.1} parent=31 // pred_check
          %p183 = pneg %p63
        $region38: #{tpu_custom_call.1} parent=31 // pred_check_branch
          %185 = sbr.rel (%p183) target = $region40
        $region39: #{tpu_custom_call.1} parent=31 // pred_region
          %186 = dma.done [#allocation6], 12288
        $region40: #{tpu_custom_call.1} parent=31 // pred_fallthru
          _
        %s187 = sand.u32 %s29, 1
        %s188 = scalar_lea.sflag [#allocation3], %s187
        %s189 = sand.u32 %s29, 1
        %s190 = smul.addr %s189, 256
        %s191 = scalar_lea.vmem [#allocation2], %s190
        %p192 = pneg %p42
        %p193 = pneg %p39
        %p194 = pneg %p63
        %p195 = pneg %p60
        %p196 = pneg %p84
        %p197 = pneg %p81
        %p198 = pneg %p110
        %p199 = pneg %p107
        %s200 = sand.u32 %s97, 1
        %s201 = scalar_lea.sflag [#allocation4], %s200
        %s202 = sand.u32 %s97, 1
        %s203 = smul.addr %s202, 384
        %s204 = scalar_lea.vmem [#allocation7], %s203
        %s205 = smul.u32 16, %s21
        %s206 = smul.u32 16, %s21
        %v207 = vld [vmem:[%s178] sm:$0xff]
        %v208 = vld [vmem:[%s178 + $0x8] sm:$0xff]
        %v209 = vld [vmem:[%s178 + $0x10] sm:$0xff]
        %v210 = vld [vmem:[%s178 + $0x18] sm:$0xff]
        %v211 = vld [vmem:[%s178 + $0x20] sm:$0xff]
        %v212 = vld [vmem:[%s178 + $0x28] sm:$0xff]
        %v213 = vld [vmem:[%s178 + $0x30] sm:$0xff]
        %v214 = vld [vmem:[%s178 + $0x38] sm:$0xff]
        %v215 = vld [vmem:[%s178 + $0x40] sm:$0xff]
        %v216 = vld [vmem:[%s178 + $0x48] sm:$0xff]
        %v217 = vld [vmem:[%s178 + $0x50] sm:$0xff]
        %v218 = vld [vmem:[%s178 + $0x58] sm:$0xff]
        %v219 = vld [vmem:[%s178 + $0x60] sm:$0xff]
        %v220 = vld [vmem:[%s178 + $0x68] sm:$0xff]
        %v221 = vld [vmem:[%s178 + $0x70] sm:$0xff]
        %v222 = vld [vmem:[%s178 + $0x78] sm:$0xff]
        %v223 = vld [vmem:[%s178 + $0x80] sm:$0xff]
        %v224 = vld [vmem:[%s178 + $0x88] sm:$0xff]
        %v225 = vld [vmem:[%s178 + $0x90] sm:$0xff]
        %v226 = vld [vmem:[%s178 + $0x98] sm:$0xff]
        %v227 = vld [vmem:[%s178 + $0xa0] sm:$0xff]
        %v228 = vld [vmem:[%s178 + $0xa8] sm:$0xff]
        %v229 = vld [vmem:[%s178 + $0xb0] sm:$0xff]
        %v230 = vld [vmem:[%s178 + $0xb8] sm:$0xff]
        %v231 = vld [vmem:[%s178 + $0xc0] sm:$0xff]
        %v232 = vld [vmem:[%s178 + $0xc8] sm:$0xff]
        %v233 = vld [vmem:[%s178 + $0xd0] sm:$0xff]
        %v234 = vld [vmem:[%s178 + $0xd8] sm:$0xff]
        %v235 = vld [vmem:[%s178 + $0xe0] sm:$0xff]
        %v236 = vld [vmem:[%s178 + $0xe8] sm:$0xff]
        %v237 = vld [vmem:[%s178 + $0xf0] sm:$0xff]
        %v238 = vld [vmem:[%s178 + $0xf8] sm:$0xff]
        %v239 = vpack.c.bf16 %v209, %v207
        %v240 = vpack.c.bf16 %v210, %v208
        %v241 = vpack.c.bf16 %v213, %v211
        %v242 = vpack.c.bf16 %v214, %v212
        %v243 = vpack.c.bf16 %v217, %v215
        %v244 = vpack.c.bf16 %v218, %v216
        %v245 = vpack.c.bf16 %v221, %v219
        %v246 = vpack.c.bf16 %v222, %v220
        %v247 = vpack.c.bf16 %v225, %v223
        %v248 = vpack.c.bf16 %v226, %v224
        %v249 = vpack.c.bf16 %v229, %v227
        %v250 = vpack.c.bf16 %v230, %v228
        %v251 = vpack.c.bf16 %v233, %v231
        %v252 = vpack.c.bf16 %v234, %v232
        %v253 = vpack.c.bf16 %v237, %v235
        %v254 = vpack.c.bf16 %v238, %v236
        %v255 = vld [vmem:[#allocation5] sm:$0xff]
        %v256 = vld [vmem:[#allocation5 + $0x8] sm:$0xff]
        %v257 = vld [vmem:[#allocation5 + $0x10] sm:$0xff]
        %v258 = vld [vmem:[#allocation5 + $0x18] sm:$0xff]
        %v259 = vld [vmem:[#allocation5 + $0x20] sm:$0xff]
        %v260 = vld [vmem:[#allocation5 + $0x28] sm:$0xff]
        %v261 = vld [vmem:[#allocation5 + $0x30] sm:$0xff]
        %v262 = vld [vmem:[#allocation5 + $0x38] sm:$0xff]
        %v263 = vld [vmem:[#allocation5 + $0x40] sm:$0xff]
        %v264 = vld [vmem:[#allocation5 + $0x48] sm:$0xff]
        %v265 = vld [vmem:[#allocation5 + $0x50] sm:$0xff]
        %v266 = vld [vmem:[#allocation5 + $0x58] sm:$0xff]
        %v267 = vld [vmem:[#allocation5 + $0x60] sm:$0xff]
        %v268 = vld [vmem:[#allocation5 + $0x68] sm:$0xff]
        %v269 = vld [vmem:[#allocation5 + $0x70] sm:$0xff]
        %v270 = vld [vmem:[#allocation5 + $0x78] sm:$0xff]
        %v271 = vld [vmem:[#allocation5 + $0x80] sm:$0xff]
        %v272 = vld [vmem:[#allocation5 + $0x88] sm:$0xff]
        %v273 = vld [vmem:[#allocation5 + $0x90] sm:$0xff]
        %v274 = vld [vmem:[#allocation5 + $0x98] sm:$0xff]
        %v275 = vld [vmem:[#allocation5 + $0xa0] sm:$0xff]
        %v276 = vld [vmem:[#allocation5 + $0xa8] sm:$0xff]
        %v277 = vld [vmem:[#allocation5 + $0xb0] sm:$0xff]
        %v278 = vld [vmem:[#allocation5 + $0xb8] sm:$0xff]
        %v279 = vld [vmem:[#allocation5 + $0xc0] sm:$0xff]
        %v280 = vld [vmem:[#allocation5 + $0xc8] sm:$0xff]
        %v281 = vld [vmem:[#allocation5 + $0xd0] sm:$0xff]
        %v282 = vld [vmem:[#allocation5 + $0xd8] sm:$0xff]
        %v283 = vld [vmem:[#allocation5 + $0xe0] sm:$0xff]
        %v284 = vld [vmem:[#allocation5 + $0xe8] sm:$0xff]
        %v285 = vld [vmem:[#allocation5 + $0xf0] sm:$0xff]
        %v286 = vld [vmem:[#allocation5 + $0xf8] sm:$0xff]
        %v287 = vld [vmem:[#allocation5 + $0x100] sm:$0xff]
        %v288 = vld [vmem:[#allocation5 + $0x108] sm:$0xff]
        %v289 = vld [vmem:[#allocation5 + $0x110] sm:$0xff]
        %v290 = vld [vmem:[#allocation5 + $0x118] sm:$0xff]
        %v291 = vld [vmem:[#allocation5 + $0x120] sm:$0xff]
        %v292 = vld [vmem:[#allocation5 + $0x128] sm:$0xff]
        %v293 = vld [vmem:[#allocation5 + $0x130] sm:$0xff]
        %v294 = vld [vmem:[#allocation5 + $0x138] sm:$0xff]
        %v295 = vld [vmem:[#allocation5 + $0x140] sm:$0xff]
        %v296 = vld [vmem:[#allocation5 + $0x148] sm:$0xff]
        %v297 = vld [vmem:[#allocation5 + $0x150] sm:$0xff]
        %v298 = vld [vmem:[#allocation5 + $0x158] sm:$0xff]
        %v299 = vld [vmem:[#allocation5 + $0x160] sm:$0xff]
        %v300 = vld [vmem:[#allocation5 + $0x168] sm:$0xff]
        %v301 = vld [vmem:[#allocation5 + $0x170] sm:$0xff]
        %v302 = vld [vmem:[#allocation5 + $0x178] sm:$0xff]
        %v303 = vld [vmem:[#allocation5 + $0x180] sm:$0xff]
        %v304 = vld [vmem:[#allocation5 + $0x188] sm:$0xff]
        %v305 = vld [vmem:[#allocation5 + $0x190] sm:$0xff]
        %v306 = vld [vmem:[#allocation5 + $0x198] sm:$0xff]
        %v307 = vld [vmem:[#allocation5 + $0x1a0] sm:$0xff]
        %v308 = vld [vmem:[#allocation5 + $0x1a8] sm:$0xff]
        %v309 = vld [vmem:[#allocation5 + $0x1b0] sm:$0xff]
        %v310 = vld [vmem:[#allocation5 + $0x1b8] sm:$0xff]
        %v311 = vld [vmem:[#allocation5 + $0x1c0] sm:$0xff]
        %v312 = vld [vmem:[#allocation5 + $0x1c8] sm:$0xff]
        %v313 = vld [vmem:[#allocation5 + $0x1d0] sm:$0xff]
        %v314 = vld [vmem:[#allocation5 + $0x1d8] sm:$0xff]
        %v315 = vld [vmem:[#allocation5 + $0x1e0] sm:$0xff]
        %v316 = vld [vmem:[#allocation5 + $0x1e8] sm:$0xff]
        %v317 = vld [vmem:[#allocation5 + $0x1f0] sm:$0xff]
        %v318 = vld [vmem:[#allocation5 + $0x1f8] sm:$0xff]
        %v319 = vld [vmem:[#allocation5 + $0x200] sm:$0xff]
        %v320 = vld [vmem:[#allocation5 + $0x208] sm:$0xff]
        %v321 = vld [vmem:[#allocation5 + $0x210] sm:$0xff]
        %v322 = vld [vmem:[#allocation5 + $0x218] sm:$0xff]
        %v323 = vld [vmem:[#allocation5 + $0x220] sm:$0xff]
        %v324 = vld [vmem:[#allocation5 + $0x228] sm:$0xff]
        %v325 = vld [vmem:[#allocation5 + $0x230] sm:$0xff]
        %v326 = vld [vmem:[#allocation5 + $0x238] sm:$0xff]
        %v327 = vld [vmem:[#allocation5 + $0x240] sm:$0xff]
        %v328 = vld [vmem:[#allocation5 + $0x248] sm:$0xff]
        %v329 = vld [vmem:[#allocation5 + $0x250] sm:$0xff]
        %v330 = vld [vmem:[#allocation5 + $0x258] sm:$0xff]
        %v331 = vld [vmem:[#allocation5 + $0x260] sm:$0xff]
        %v332 = vld [vmem:[#allocation5 + $0x268] sm:$0xff]
        %v333 = vld [vmem:[#allocation5 + $0x270] sm:$0xff]
        %v334 = vld [vmem:[#allocation5 + $0x278] sm:$0xff]
        %v335 = vld [vmem:[#allocation5 + $0x280] sm:$0xff]
        %v336 = vld [vmem:[#allocation5 + $0x288] sm:$0xff]
        %v337 = vld [vmem:[#allocation5 + $0x290] sm:$0xff]
        %v338 = vld [vmem:[#allocation5 + $0x298] sm:$0xff]
        %v339 = vld [vmem:[#allocation5 + $0x2a0] sm:$0xff]
        %v340 = vld [vmem:[#allocation5 + $0x2a8] sm:$0xff]
        %v341 = vld [vmem:[#allocation5 + $0x2b0] sm:$0xff]
        %v342 = vld [vmem:[#allocation5 + $0x2b8] sm:$0xff]
        %v343 = vld [vmem:[#allocation5 + $0x2c0] sm:$0xff]
        %v344 = vld [vmem:[#allocation5 + $0x2c8] sm:$0xff]
        %v345 = vld [vmem:[#allocation5 + $0x2d0] sm:$0xff]
        %v346 = vld [vmem:[#allocation5 + $0x2d8] sm:$0xff]
        %v347 = vld [vmem:[#allocation5 + $0x2e0] sm:$0xff]
        %v348 = vld [vmem:[#allocation5 + $0x2e8] sm:$0xff]
        %v349 = vld [vmem:[#allocation5 + $0x2f0] sm:$0xff]
        %v350 = vld [vmem:[#allocation5 + $0x2f8] sm:$0xff]
        %v351 = vld [vmem:[%s2] sm:$0x3f]
        %v353 = vlaneseq
        %v354 = vshrl.u32 %v353, 7
        %v355 = vsub.s32 0, %v354
        %v356 = vrot.slane %v351, %v355
        %v357 = vlaneseq
        %v358 = vshrl.u32 %v357, 7
        %v359 = vsub.s32 1, %v358
        %v360 = vrot.slane %v351, %v359
        %v361 = vlaneseq
        %v362 = vshrl.u32 %v361, 7
        %v363 = vsub.s32 2, %v362
        %v364 = vrot.slane %v351, %v363
        %v365 = vlaneseq
        %v366 = vshrl.u32 %v365, 7
        %v367 = vsub.s32 3, %v366
        %v368 = vrot.slane %v351, %v367
        %v369 = vlaneseq
        %v370 = vshrl.u32 %v369, 7
        %v371 = vsub.s32 4, %v370
        %v372 = vrot.slane %v351, %v371
        %v373 = vlaneseq
        %v374 = vshrl.u32 %v373, 7
        %v375 = vsub.s32 5, %v374
        %v376 = vrot.slane %v351, %v375
        %v479 = vunpack.c.l.b16 %v255
        %v480 = vunpack.c.h.b16 %v255
        %v481 = vunpack.c.l.b16 %v256
        %v482 = vunpack.c.h.b16 %v256
        %v483 = vunpack.c.l.b16 %v257
        %v484 = vunpack.c.h.b16 %v257
        %v485 = vunpack.c.l.b16 %v258
        %v486 = vunpack.c.h.b16 %v258
        %v487 = vunpack.c.l.b16 %v259
        %v488 = vunpack.c.h.b16 %v259
        %v489 = vunpack.c.l.b16 %v260
        %v490 = vunpack.c.h.b16 %v260
        %v491 = vunpack.c.l.b16 %v261
        %v492 = vunpack.c.h.b16 %v261
        %v493 = vunpack.c.l.b16 %v262
        %v494 = vunpack.c.h.b16 %v262
        %v495 = vunpack.c.l.b16 %v263
        %v496 = vunpack.c.h.b16 %v263
        %v497 = vunpack.c.l.b16 %v264
        %v498 = vunpack.c.h.b16 %v264
        %v499 = vunpack.c.l.b16 %v265
        %v500 = vunpack.c.h.b16 %v265
        %v501 = vunpack.c.l.b16 %v266
        %v502 = vunpack.c.h.b16 %v266
        %v503 = vunpack.c.l.b16 %v267
        %v504 = vunpack.c.h.b16 %v267
        %v505 = vunpack.c.l.b16 %v268
        %v506 = vunpack.c.h.b16 %v268
        %v507 = vunpack.c.l.b16 %v269
        %v508 = vunpack.c.h.b16 %v269
        %v509 = vunpack.c.l.b16 %v270
        %v510 = vunpack.c.h.b16 %v270
        %v511 = vunpack.c.l.b16 %v271
        %v512 = vunpack.c.h.b16 %v271
        %v513 = vunpack.c.l.b16 %v272
        %v514 = vunpack.c.h.b16 %v272
        %v515 = vunpack.c.l.b16 %v273
        %v516 = vunpack.c.h.b16 %v273
        %v517 = vunpack.c.l.b16 %v274
        %v518 = vunpack.c.h.b16 %v274
        %v519 = vunpack.c.l.b16 %v275
        %v520 = vunpack.c.h.b16 %v275
        %v521 = vunpack.c.l.b16 %v276
        %v522 = vunpack.c.h.b16 %v276
        %v523 = vunpack.c.l.b16 %v277
        %v524 = vunpack.c.h.b16 %v277
        %v525 = vunpack.c.l.b16 %v278
        %v526 = vunpack.c.h.b16 %v278
        %v527 = vunpack.c.l.b16 %v279
        %v528 = vunpack.c.h.b16 %v279
        %v529 = vunpack.c.l.b16 %v280
        %v530 = vunpack.c.h.b16 %v280
        %v531 = vunpack.c.l.b16 %v281
        %v532 = vunpack.c.h.b16 %v281
        %v533 = vunpack.c.l.b16 %v282
        %v534 = vunpack.c.h.b16 %v282
        %v535 = vunpack.c.l.b16 %v283
        %v536 = vunpack.c.h.b16 %v283
        %v537 = vunpack.c.l.b16 %v284
        %v538 = vunpack.c.h.b16 %v284
        %v539 = vunpack.c.l.b16 %v285
        %v540 = vunpack.c.h.b16 %v285
        %v541 = vunpack.c.l.b16 %v286
        %v542 = vunpack.c.h.b16 %v286
        %v543 = vunpack.c.l.b16 %v287
        %v544 = vunpack.c.h.b16 %v287
        %v545 = vunpack.c.l.b16 %v288
        %v546 = vunpack.c.h.b16 %v288
        %v547 = vunpack.c.l.b16 %v289
        %v548 = vunpack.c.h.b16 %v289
        %v549 = vunpack.c.l.b16 %v290
        %v550 = vunpack.c.h.b16 %v290
        %v551 = vunpack.c.l.b16 %v291
        %v552 = vunpack.c.h.b16 %v291
        %v553 = vunpack.c.l.b16 %v292
        %v554 = vunpack.c.h.b16 %v292
        %v555 = vunpack.c.l.b16 %v293
        %v556 = vunpack.c.h.b16 %v293
        %v557 = vunpack.c.l.b16 %v294
        %v558 = vunpack.c.h.b16 %v294
        %v559 = vunpack.c.l.b16 %v295
        %v560 = vunpack.c.h.b16 %v295
        %v561 = vunpack.c.l.b16 %v296
        %v562 = vunpack.c.h.b16 %v296
        %v563 = vunpack.c.l.b16 %v297
        %v564 = vunpack.c.h.b16 %v297
        %v565 = vunpack.c.l.b16 %v298
        %v566 = vunpack.c.h.b16 %v298
        %v567 = vunpack.c.l.b16 %v299
        %v568 = vunpack.c.h.b16 %v299
        %v569 = vunpack.c.l.b16 %v300
        %v570 = vunpack.c.h.b16 %v300
        %v571 = vunpack.c.l.b16 %v301
        %v572 = vunpack.c.h.b16 %v301
        %v573 = vunpack.c.l.b16 %v302
        %v574 = vunpack.c.h.b16 %v302
        %v575 = vunpack.c.l.b16 %v303
        %v576 = vunpack.c.h.b16 %v303
        %v577 = vunpack.c.l.b16 %v304
        %v578 = vunpack.c.h.b16 %v304
        %v579 = vunpack.c.l.b16 %v305
        %v580 = vunpack.c.h.b16 %v305
        %v581 = vunpack.c.l.b16 %v306
        %v582 = vunpack.c.h.b16 %v306
        %v583 = vunpack.c.l.b16 %v307
        %v584 = vunpack.c.h.b16 %v307
        %v585 = vunpack.c.l.b16 %v308
        %v586 = vunpack.c.h.b16 %v308
        %v587 = vunpack.c.l.b16 %v309
        %v588 = vunpack.c.h.b16 %v309
        %v589 = vunpack.c.l.b16 %v310
        %v590 = vunpack.c.h.b16 %v310
        %v591 = vunpack.c.l.b16 %v311
        %v592 = vunpack.c.h.b16 %v311
        %v593 = vunpack.c.l.b16 %v312
        %v594 = vunpack.c.h.b16 %v312
        %v595 = vunpack.c.l.b16 %v313
        %v596 = vunpack.c.h.b16 %v313
        %v597 = vunpack.c.l.b16 %v314
        %v598 = vunpack.c.h.b16 %v314
        %v599 = vunpack.c.l.b16 %v315
        %v600 = vunpack.c.h.b16 %v315
        %v601 = vunpack.c.l.b16 %v316
        %v602 = vunpack.c.h.b16 %v316
        %v603 = vunpack.c.l.b16 %v317
        %v604 = vunpack.c.h.b16 %v317
        %v605 = vunpack.c.l.b16 %v318
        %v606 = vunpack.c.h.b16 %v318
        %v607 = vunpack.c.l.b16 %v319
        %v608 = vunpack.c.h.b16 %v319
        %v609 = vunpack.c.l.b16 %v320
        %v610 = vunpack.c.h.b16 %v320
        %v611 = vunpack.c.l.b16 %v321
        %v612 = vunpack.c.h.b16 %v321
        %v613 = vunpack.c.l.b16 %v322
        %v614 = vunpack.c.h.b16 %v322
        %v615 = vunpack.c.l.b16 %v323
        %v616 = vunpack.c.h.b16 %v323
        %v617 = vunpack.c.l.b16 %v324
        %v618 = vunpack.c.h.b16 %v324
        %v619 = vunpack.c.l.b16 %v325
        %v620 = vunpack.c.h.b16 %v325
        %v621 = vunpack.c.l.b16 %v326
        %v622 = vunpack.c.h.b16 %v326
        %v623 = vunpack.c.l.b16 %v327
        %v624 = vunpack.c.h.b16 %v327
        %v625 = vunpack.c.l.b16 %v328
        %v626 = vunpack.c.h.b16 %v328
        %v627 = vunpack.c.l.b16 %v329
        %v628 = vunpack.c.h.b16 %v329
        %v629 = vunpack.c.l.b16 %v330
        %v630 = vunpack.c.h.b16 %v330
        %v631 = vunpack.c.l.b16 %v331
        %v632 = vunpack.c.h.b16 %v331
        %v633 = vunpack.c.l.b16 %v332
        %v634 = vunpack.c.h.b16 %v332
        %v635 = vunpack.c.l.b16 %v333
        %v636 = vunpack.c.h.b16 %v333
        %v637 = vunpack.c.l.b16 %v334
        %v638 = vunpack.c.h.b16 %v334
        %v639 = vunpack.c.l.b16 %v335
        %v640 = vunpack.c.h.b16 %v335
        %v641 = vunpack.c.l.b16 %v336
        %v642 = vunpack.c.h.b16 %v336
        %v643 = vunpack.c.l.b16 %v337
        %v644 = vunpack.c.h.b16 %v337
        %v645 = vunpack.c.l.b16 %v338
        %v646 = vunpack.c.h.b16 %v338
        %v647 = vunpack.c.l.b16 %v339
        %v648 = vunpack.c.h.b16 %v339
        %v649 = vunpack.c.l.b16 %v340
        %v650 = vunpack.c.h.b16 %v340
        %v651 = vunpack.c.l.b16 %v341
        %v652 = vunpack.c.h.b16 %v341
        %v653 = vunpack.c.l.b16 %v342
        %v654 = vunpack.c.h.b16 %v342
        %v655 = vunpack.c.l.b16 %v343
        %v656 = vunpack.c.h.b16 %v343
        %v657 = vunpack.c.l.b16 %v344
        %v658 = vunpack.c.h.b16 %v344
        %v659 = vunpack.c.l.b16 %v345
        %v660 = vunpack.c.h.b16 %v345
        %v661 = vunpack.c.l.b16 %v346
        %v662 = vunpack.c.h.b16 %v346
        %v663 = vunpack.c.l.b16 %v347
        %v664 = vunpack.c.h.b16 %v347
        %v665 = vunpack.c.l.b16 %v348
        %v666 = vunpack.c.h.b16 %v348
        %v667 = vunpack.c.l.b16 %v349
        %v668 = vunpack.c.h.b16 %v349
        %v669 = vunpack.c.l.b16 %v350
        %v670 = vunpack.c.h.b16 %v350
        %v671 = vpack.c.b16 %v485, %v479
        %v672 = vpack.c.b16 %v486, %v480
        %v673 = vpack.c.b16 %v487, %v481
        %v674 = vpack.c.b16 %v488, %v482
        %v675 = vpack.c.b16 %v489, %v483
        %v676 = vpack.c.b16 %v490, %v484
        %v677 = vpack.c.b16 %v497, %v491
        %v678 = vpack.c.b16 %v498, %v492
        %v679 = vpack.c.b16 %v499, %v493
        %v680 = vpack.c.b16 %v500, %v494
        %v681 = vpack.c.b16 %v501, %v495
        %v682 = vpack.c.b16 %v502, %v496
        %v683 = vpack.c.b16 %v509, %v503
        %v684 = vpack.c.b16 %v510, %v504
        %v685 = vpack.c.b16 %v511, %v505
        %v686 = vpack.c.b16 %v512, %v506
        %v687 = vpack.c.b16 %v513, %v507
        %v688 = vpack.c.b16 %v514, %v508
        %v689 = vpack.c.b16 %v521, %v515
        %v690 = vpack.c.b16 %v522, %v516
        %v691 = vpack.c.b16 %v523, %v517
        %v692 = vpack.c.b16 %v524, %v518
        %v693 = vpack.c.b16 %v525, %v519
        %v694 = vpack.c.b16 %v526, %v520
        %v695 = vpack.c.b16 %v533, %v527
        %v696 = vpack.c.b16 %v534, %v528
        %v697 = vpack.c.b16 %v535, %v529
        %v698 = vpack.c.b16 %v536, %v530
        %v699 = vpack.c.b16 %v537, %v531
        %v700 = vpack.c.b16 %v538, %v532
        %v701 = vpack.c.b16 %v545, %v539
        %v702 = vpack.c.b16 %v546, %v540
        %v703 = vpack.c.b16 %v547, %v541
        %v704 = vpack.c.b16 %v548, %v542
        %v705 = vpack.c.b16 %v549, %v543
        %v706 = vpack.c.b16 %v550, %v544
        %v707 = vpack.c.b16 %v557, %v551
        %v708 = vpack.c.b16 %v558, %v552
        %v709 = vpack.c.b16 %v559, %v553
        %v710 = vpack.c.b16 %v560, %v554
        %v711 = vpack.c.b16 %v561, %v555
        %v712 = vpack.c.b16 %v562, %v556
        %v713 = vpack.c.b16 %v569, %v563
        %v714 = vpack.c.b16 %v570, %v564
        %v715 = vpack.c.b16 %v571, %v565
        %v716 = vpack.c.b16 %v572, %v566
        %v717 = vpack.c.b16 %v573, %v567
        %v718 = vpack.c.b16 %v574, %v568
        %v719 = vpack.c.b16 %v581, %v575
        %v720 = vpack.c.b16 %v582, %v576
        %v721 = vpack.c.b16 %v583, %v577
        %v722 = vpack.c.b16 %v584, %v578
        %v723 = vpack.c.b16 %v585, %v579
        %v724 = vpack.c.b16 %v586, %v580
        %v725 = vpack.c.b16 %v593, %v587
        %v726 = vpack.c.b16 %v594, %v588
        %v727 = vpack.c.b16 %v595, %v589
        %v728 = vpack.c.b16 %v596, %v590
        %v729 = vpack.c.b16 %v597, %v591
        %v730 = vpack.c.b16 %v598, %v592
        %v731 = vpack.c.b16 %v605, %v599
        %v732 = vpack.c.b16 %v606, %v600
        %v733 = vpack.c.b16 %v607, %v601
        %v734 = vpack.c.b16 %v608, %v602
        %v735 = vpack.c.b16 %v609, %v603
        %v736 = vpack.c.b16 %v610, %v604
        %v737 = vpack.c.b16 %v617, %v611
        %v738 = vpack.c.b16 %v618, %v612
        %v739 = vpack.c.b16 %v619, %v613
        %v740 = vpack.c.b16 %v620, %v614
        %v741 = vpack.c.b16 %v621, %v615
        %v742 = vpack.c.b16 %v622, %v616
        %v743 = vpack.c.b16 %v629, %v623
        %v744 = vpack.c.b16 %v630, %v624
        %v745 = vpack.c.b16 %v631, %v625
        %v746 = vpack.c.b16 %v632, %v626
        %v747 = vpack.c.b16 %v633, %v627
        %v748 = vpack.c.b16 %v634, %v628
        %v749 = vpack.c.b16 %v641, %v635
        %v750 = vpack.c.b16 %v642, %v636
        %v751 = vpack.c.b16 %v643, %v637
        %v752 = vpack.c.b16 %v644, %v638
        %v753 = vpack.c.b16 %v645, %v639
        %v754 = vpack.c.b16 %v646, %v640
        %v755 = vpack.c.b16 %v653, %v647
        %v756 = vpack.c.b16 %v654, %v648
        %v757 = vpack.c.b16 %v655, %v649
        %v758 = vpack.c.b16 %v656, %v650
        %v759 = vpack.c.b16 %v657, %v651
        %v760 = vpack.c.b16 %v658, %v652
        %v761 = vpack.c.b16 %v665, %v659
        %v762 = vpack.c.b16 %v666, %v660
        %v763 = vpack.c.b16 %v667, %v661
        %v764 = vpack.c.b16 %v668, %v662
        %v765 = vpack.c.b16 %v669, %v663
        %v766 = vpack.c.b16 %v670, %v664
        %863 = vmatprep.subr.bf16.mxu0 %v672
        %864 = vmatpush1.bf16.msra.mxu0 %v671
        %865 = vmatprep.subr.bf16.mxu0 %v678
        %866 = vmatpush1.bf16.msra.mxu0 %v677
        %867 = vmatprep.subr.bf16.mxu0 %v684
        %868 = vmatpush1.bf16.msra.mxu0 %v683
        %869 = vmatprep.subr.bf16.mxu0 %v690
        %870 = vmatpush1.bf16.msra.mxu0 %v689
        %871 = vmatprep.subr.bf16.mxu0 %v696
        %872 = vmatpush1.bf16.msra.mxu0 %v695
        %873 = vmatprep.subr.bf16.mxu0 %v702
        %874 = vmatpush1.bf16.msra.mxu0 %v701
        %875 = vmatprep.subr.bf16.mxu0 %v708
        %876 = vmatpush1.bf16.msra.mxu0 %v707
        %877 = vmatprep.subr.bf16.mxu0 %v714
        %878 = vmatpush1.bf16.msra.mxu0 %v713
        %879 = vmatprep.subr.bf16.mxu0 %v720
        %880 = vmatpush1.bf16.msra.mxu0 %v719
        %881 = vmatprep.subr.bf16.mxu0 %v726
        %882 = vmatpush1.bf16.msra.mxu0 %v725
        %883 = vmatprep.subr.bf16.mxu0 %v732
        %884 = vmatpush1.bf16.msra.mxu0 %v731
        %885 = vmatprep.subr.bf16.mxu0 %v738
        %886 = vmatpush1.bf16.msra.mxu0 %v737
        %887 = vmatprep.subr.bf16.mxu0 %v744
        %888 = vmatpush1.bf16.msra.mxu0 %v743
        %889 = vmatprep.subr.bf16.mxu0 %v750
        %890 = vmatpush1.bf16.msra.mxu0 %v749
        %891 = vmatprep.subr.bf16.mxu0 %v756
        %892 = vmatpush1.bf16.msra.mxu0 %v755
        %893 = vmatprep.subr.bf16.mxu0 %v762
        %894 = vmatpush1.bf16.msra.mxu0 %v761
        %895 = vmatprep.mubr.bf16.mxu0 %v240
        %896 = vmatmul.mubr.bf16.gmra.mrb[0].mxu0 %v239
        %v897 = vpop.f32.mrb[0].mxu0
        %v898 = vadd.f32 %v356, %v897
        %v899 = vpop.f32.mrb[0].mxu0
        %v900 = vadd.f32 %v360, %v899
        %v901 = vpop.f32.mrb[0].mxu0
        %v902 = vadd.f32 %v356, %v901
        %v903 = vpop.f32.mrb[0].mxu0
        %v904 = vadd.f32 %v360, %v903
        %905 = vmatprep.mubr.bf16.mxu0 %v242
        %906 = vmatmul.mubr.bf16.gmra.mrb[0].mxu0 %v241
        %v907 = vpop.f32.mrb[0].mxu0
        %v908 = vadd.f32 %v356, %v907
        %v909 = vpop.f32.mrb[0].mxu0
        %v910 = vadd.f32 %v360, %v909
        %v911 = vpop.f32.mrb[0].mxu0
        %v912 = vadd.f32 %v356, %v911
        %v913 = vpop.f32.mrb[0].mxu0
        %v914 = vadd.f32 %v360, %v913
        %915 = vmatprep.mubr.bf16.mxu0 %v244
        %916 = vmatmul.mubr.bf16.gmra.mrb[0].mxu0 %v243
        %v917 = vpop.f32.mrb[0].mxu0
        %v918 = vadd.f32 %v356, %v917
        %v919 = vpop.f32.mrb[0].mxu0
        %v920 = vadd.f32 %v360, %v919
        %v921 = vpop.f32.mrb[0].mxu0
        %v922 = vadd.f32 %v356, %v921
        %v923 = vpop.f32.mrb[0].mxu0
        %v924 = vadd.f32 %v360, %v923
        %925 = vmatprep.mubr.bf16.mxu0 %v246
        %926 = vmatmul.mubr.bf16.gmra.mrb[0].mxu0 %v245
        %v927 = vpop.f32.mrb[0].mxu0
        %v928 = vadd.f32 %v356, %v927
        %v929 = vpop.f32.mrb[0].mxu0
        %v930 = vadd.f32 %v360, %v929
        %v931 = vpop.f32.mrb[0].mxu0
        %v932 = vadd.f32 %v356, %v931
        %v933 = vpop.f32.mrb[0].mxu0
        %v934 = vadd.f32 %v360, %v933
        %935 = vmatprep.mubr.bf16.mxu0 %v248
        %936 = vmatmul.mubr.bf16.gmra.mrb[0].mxu0 %v247
        %v937 = vpop.f32.mrb[0].mxu0
        %v938 = vadd.f32 %v356, %v937
        %v939 = vpop.f32.mrb[0].mxu0
        %v940 = vadd.f32 %v360, %v939
        %v941 = vpop.f32.mrb[0].mxu0
        %v942 = vadd.f32 %v356, %v941
        %v943 = vpop.f32.mrb[0].mxu0
        %v944 = vadd.f32 %v360, %v943
        %945 = vmatprep.mubr.bf16.mxu0 %v250
        %946 = vmatmul.mubr.bf16.gmra.mrb[0].mxu0 %v249
        %v947 = vpop.f32.mrb[0].mxu0
        %v948 = vadd.f32 %v356, %v947
        %v949 = vpop.f32.mrb[0].mxu0
        %v950 = vadd.f32 %v360, %v949
        %v951 = vpop.f32.mrb[0].mxu0
        %v952 = vadd.f32 %v356, %v951
        %v953 = vpop.f32.mrb[0].mxu0
        %v954 = vadd.f32 %v360, %v953
        %955 = vmatprep.mubr.bf16.mxu0 %v252
        %956 = vmatmul.mubr.bf16.gmra.mrb[0].mxu0 %v251
        %v957 = vpop.f32.mrb[0].mxu0
        %v958 = vadd.f32 %v356, %v957
        %v959 = vpop.f32.mrb[0].mxu0
        %v960 = vadd.f32 %v360, %v959
        %v961 = vpop.f32.mrb[0].mxu0
        %v962 = vadd.f32 %v356, %v961
        %v963 = vpop.f32.mrb[0].mxu0
        %v964 = vadd.f32 %v360, %v963
        %965 = vmatprep.mubr.bf16.mxu0 %v254
        %966 = vmatmul.mubr.bf16.gmra.mrb[0].mxu0 %v253
        %v967 = vpop.f32.mrb[0].mxu0
        %v968 = vadd.f32 %v356, %v967
        %v969 = vpop.f32.mrb[0].mxu0
        %v970 = vadd.f32 %v360, %v969
        %v971 = vpop.f32.mrb[0].mxu0
        %v972 = vadd.f32 %v356, %v971
        %v973 = vpop.f32.mrb[0].mxu0
        %v974 = vadd.f32 %v360, %v973
        %975 = vdwg.mxu0
        %976 = vmatprep.subr.bf16.mxu0 %v674
        %977 = vmatpush1.bf16.msra.mxu0 %v673
        %978 = vmatprep.subr.bf16.mxu0 %v680
        %979 = vmatpush1.bf16.msra.mxu0 %v679
        %980 = vmatprep.subr.bf16.mxu0 %v686
        %981 = vmatpush1.bf16.msra.mxu0 %v685
        %982 = vmatprep.subr.bf16.mxu0 %v692
        %983 = vmatpush1.bf16.msra.mxu0 %v691
        %984 = vmatprep.subr.bf16.mxu0 %v698
        %985 = vmatpush1.bf16.msra.mxu0 %v697
        %986 = vmatprep.subr.bf16.mxu0 %v704
        %987 = vmatpush1.bf16.msra.mxu0 %v703
        %988 = vmatprep.subr.bf16.mxu0 %v710
        %989 = vmatpush1.bf16.msra.mxu0 %v709
        %990 = vmatprep.subr.bf16.mxu0 %v716
        %991 = vmatpush1.bf16.msra.mxu0 %v715
        %992 = vmatprep.subr.bf16.mxu0 %v722
        %993 = vmatpush1.bf16.msra.mxu0 %v721
        %994 = vmatprep.subr.bf16.mxu0 %v728
        %995 = vmatpush1.bf16.msra.mxu0 %v727
        %996 = vmatprep.subr.bf16.mxu0 %v734
        %997 = vmatpush1.bf16.msra.mxu0 %v733
        %998 = vmatprep.subr.bf16.mxu0 %v740
        %999 = vmatpush1.bf16.msra.mxu0 %v739
        %1000 = vmatprep.subr.bf16.mxu0 %v746
        %1001 = vmatpush1.bf16.msra.mxu0 %v745
        %1002 = vmatprep.subr.bf16.mxu0 %v752
        %1003 = vmatpush1.bf16.msra.mxu0 %v751
        %1004 = vmatprep.subr.bf16.mxu0 %v758
        %1005 = vmatpush1.bf16.msra.mxu0 %v757
        %1006 = vmatprep.subr.bf16.mxu0 %v764
        %1007 = vmatpush1.bf16.msra.mxu0 %v763
        %1008 = vmatprep.mubr.bf16.mxu0 %v240
        %1009 = vmatmul.mubr.bf16.gmra.mrb[0].mxu0 %v239
        %v1010 = vpop.f32.mrb[0].mxu0
        %v1011 = vadd.f32 %v364, %v1010
        %v1012 = vpop.f32.mrb[0].mxu0
        %v1013 = vadd.f32 %v368, %v1012
        %v1014 = vpop.f32.mrb[0].mxu0
        %v1015 = vadd.f32 %v364, %v1014
        %v1016 = vpop.f32.mrb[0].mxu0
        %v1017 = vadd.f32 %v368, %v1016
        %1018 = vmatprep.mubr.bf16.mxu0 %v242
        %1019 = vmatmul.mubr.bf16.gmra.mrb[0].mxu0 %v241
        %v1020 = vpop.f32.mrb[0].mxu0
        %v1021 = vadd.f32 %v364, %v1020
        %v1022 = vpop.f32.mrb[0].mxu0
        %v1023 = vadd.f32 %v368, %v1022
        %v1024 = vpop.f32.mrb[0].mxu0
        %v1025 = vadd.f32 %v364, %v1024
        %v1026 = vpop.f32.mrb[0].mxu0
        %v1027 = vadd.f32 %v368, %v1026
        %1028 = vmatprep.mubr.bf16.mxu0 %v244
        %1029 = vmatmul.mubr.bf16.gmra.mrb[0].mxu0 %v243
        %v1030 = vpop.f32.mrb[0].mxu0
        %v1031 = vadd.f32 %v364, %v1030
        %v1032 = vpop.f32.mrb[0].mxu0
        %v1033 = vadd.f32 %v368, %v1032
        %v1034 = vpop.f32.mrb[0].mxu0
        %v1035 = vadd.f32 %v364, %v1034
        %v1036 = vpop.f32.mrb[0].mxu0
        %v1037 = vadd.f32 %v368, %v1036
        %1038 = vmatprep.mubr.bf16.mxu0 %v246
        %1039 = vmatmul.mubr.bf16.gmra.mrb[0].mxu0 %v245
        %v1040 = vpop.f32.mrb[0].mxu0
        %v1041 = vadd.f32 %v364, %v1040
        %v1042 = vpop.f32.mrb[0].mxu0
        %v1043 = vadd.f32 %v368, %v1042
        %v1044 = vpop.f32.mrb[0].mxu0
        %v1045 = vadd.f32 %v364, %v1044
        %v1046 = vpop.f32.mrb[0].mxu0
        %v1047 = vadd.f32 %v368, %v1046
        %1048 = vmatprep.mubr.bf16.mxu0 %v248
        %1049 = vmatmul.mubr.bf16.gmra.mrb[0].mxu0 %v247
        %v1050 = vpop.f32.mrb[0].mxu0
        %v1051 = vadd.f32 %v364, %v1050
        %v1052 = vpop.f32.mrb[0].mxu0
        %v1053 = vadd.f32 %v368, %v1052
        %v1054 = vpop.f32.mrb[0].mxu0
        %v1055 = vadd.f32 %v364, %v1054
        %v1056 = vpop.f32.mrb[0].mxu0
        %v1057 = vadd.f32 %v368, %v1056
        %1058 = vmatprep.mubr.bf16.mxu0 %v250
        %1059 = vmatmul.mubr.bf16.gmra.mrb[0].mxu0 %v249
        %v1060 = vpop.f32.mrb[0].mxu0
        %v1061 = vadd.f32 %v364, %v1060
        %v1062 = vpop.f32.mrb[0].mxu0
        %v1063 = vadd.f32 %v368, %v1062
        %v1064 = vpop.f32.mrb[0].mxu0
        %v1065 = vadd.f32 %v364, %v1064
        %v1066 = vpop.f32.mrb[0].mxu0
        %v1067 = vadd.f32 %v368, %v1066
        %1068 = vmatprep.mubr.bf16.mxu0 %v252
        %1069 = vmatmul.mubr.bf16.gmra.mrb[0].mxu0 %v251
        %v1070 = vpop.f32.mrb[0].mxu0
        %v1071 = vadd.f32 %v364, %v1070
        %v1072 = vpop.f32.mrb[0].mxu0
        %v1073 = vadd.f32 %v368, %v1072
        %v1074 = vpop.f32.mrb[0].mxu0
        %v1075 = vadd.f32 %v364, %v1074
        %v1076 = vpop.f32.mrb[0].mxu0
        %v1077 = vadd.f32 %v368, %v1076
        %1078 = vmatprep.mubr.bf16.mxu0 %v254
        %1079 = vmatmul.mubr.bf16.gmra.mrb[0].mxu0 %v253
        %v1080 = vpop.f32.mrb[0].mxu0
        %v1081 = vadd.f32 %v364, %v1080
        %v1082 = vpop.f32.mrb[0].mxu0
        %v1083 = vadd.f32 %v368, %v1082
        %v1084 = vpop.f32.mrb[0].mxu0
        %v1085 = vadd.f32 %v364, %v1084
        %v1086 = vpop.f32.mrb[0].mxu0
        %v1087 = vadd.f32 %v368, %v1086
        %1088 = vdwg.mxu0
        %1089 = vmatprep.subr.bf16.mxu0 %v676
        %1090 = vmatpush1.bf16.msra.mxu0 %v675
        %1091 = vmatprep.subr.bf16.mxu0 %v682
        %1092 = vmatpush1.bf16.msra.mxu0 %v681
        %1093 = vmatprep.subr.bf16.mxu0 %v688
        %1094 = vmatpush1.bf16.msra.mxu0 %v687
        %1095 = vmatprep.subr.bf16.mxu0 %v694
        %1096 = vmatpush1.bf16.msra.mxu0 %v693
        %1097 = vmatprep.subr.bf16.mxu0 %v700
        %1098 = vmatpush1.bf16.msra.mxu0 %v699
        %1099 = vmatprep.subr.bf16.mxu0 %v706
        %1100 = vmatpush1.bf16.msra.mxu0 %v705
        %1101 = vmatprep.subr.bf16.mxu0 %v712
        %1102 = vmatpush1.bf16.msra.mxu0 %v711
        %1103 = vmatprep.subr.bf16.mxu0 %v718
        %1104 = vmatpush1.bf16.msra.mxu0 %v717
        %1105 = vmatprep.subr.bf16.mxu0 %v724
        %1106 = vmatpush1.bf16.msra.mxu0 %v723
        %1107 = vmatprep.subr.bf16.mxu0 %v730
        %1108 = vmatpush1.bf16.msra.mxu0 %v729
        %1109 = vmatprep.subr.bf16.mxu0 %v736
        %1110 = vmatpush1.bf16.msra.mxu0 %v735
        %1111 = vmatprep.subr.bf16.mxu0 %v742
        %1112 = vmatpush1.bf16.msra.mxu0 %v741
        %1113 = vmatprep.subr.bf16.mxu0 %v748
        %1114 = vmatpush1.bf16.msra.mxu0 %v747
        %1115 = vmatprep.subr.bf16.mxu0 %v754
        %1116 = vmatpush1.bf16.msra.mxu0 %v753
        %1117 = vmatprep.subr.bf16.mxu0 %v760
        %1118 = vmatpush1.bf16.msra.mxu0 %v759
        %1119 = vmatprep.subr.bf16.mxu0 %v766
        %1120 = vmatpush1.bf16.msra.mxu0 %v765
        %1121 = vmatprep.mubr.bf16.mxu0 %v240
        %1122 = vmatmul.mubr.bf16.gmra.mrb[0].mxu0 %v239
        %v1123 = vpop.f32.mrb[0].mxu0
        %v1124 = vadd.f32 %v372, %v1123
        %v1125 = vpop.f32.mrb[0].mxu0
        %v1126 = vadd.f32 %v376, %v1125
        %v1127 = vpop.f32.mrb[0].mxu0
        %v1128 = vadd.f32 %v372, %v1127
        %v1129 = vpop.f32.mrb[0].mxu0
        %v1130 = vadd.f32 %v376, %v1129
        %1131 = vmatprep.mubr.bf16.mxu0 %v242
        %1132 = vmatmul.mubr.bf16.gmra.mrb[0].mxu0 %v241
        %v1133 = vpop.f32.mrb[0].mxu0
        %v1134 = vadd.f32 %v372, %v1133
        %v1135 = vpop.f32.mrb[0].mxu0
        %v1136 = vadd.f32 %v376, %v1135
        %v1137 = vpop.f32.mrb[0].mxu0
        %v1138 = vadd.f32 %v372, %v1137
        %v1139 = vpop.f32.mrb[0].mxu0
        %v1140 = vadd.f32 %v376, %v1139
        %1141 = vmatprep.mubr.bf16.mxu0 %v244
        %1142 = vmatmul.mubr.bf16.gmra.mrb[0].mxu0 %v243
        %v1143 = vpop.f32.mrb[0].mxu0
        %v1144 = vadd.f32 %v372, %v1143
        %v1145 = vpop.f32.mrb[0].mxu0
        %v1146 = vadd.f32 %v376, %v1145
        %v1147 = vpop.f32.mrb[0].mxu0
        %v1148 = vadd.f32 %v372, %v1147
        %v1149 = vpop.f32.mrb[0].mxu0
        %v1150 = vadd.f32 %v376, %v1149
        %1151 = vmatprep.mubr.bf16.mxu0 %v246
        %1152 = vmatmul.mubr.bf16.gmra.mrb[0].mxu0 %v245
        %v1153 = vpop.f32.mrb[0].mxu0
        %v1154 = vadd.f32 %v372, %v1153
        %v1155 = vpop.f32.mrb[0].mxu0
        %v1156 = vadd.f32 %v376, %v1155
        %v1157 = vpop.f32.mrb[0].mxu0
        %v1158 = vadd.f32 %v372, %v1157
        %v1159 = vpop.f32.mrb[0].mxu0
        %v1160 = vadd.f32 %v376, %v1159
        %1161 = vmatprep.mubr.bf16.mxu0 %v248
        %1162 = vmatmul.mubr.bf16.gmra.mrb[0].mxu0 %v247
        %v1163 = vpop.f32.mrb[0].mxu0
        %v1164 = vadd.f32 %v372, %v1163
        %v1165 = vpop.f32.mrb[0].mxu0
        %v1166 = vadd.f32 %v376, %v1165
        %v1167 = vpop.f32.mrb[0].mxu0
        %v1168 = vadd.f32 %v372, %v1167
        %v1169 = vpop.f32.mrb[0].mxu0
        %v1170 = vadd.f32 %v376, %v1169
        %1171 = vmatprep.mubr.bf16.mxu0 %v250
        %1172 = vmatmul.mubr.bf16.gmra.mrb[0].mxu0 %v249
        %v1173 = vpop.f32.mrb[0].mxu0
        %v1174 = vadd.f32 %v372, %v1173
        %v1175 = vpop.f32.mrb[0].mxu0
        %v1176 = vadd.f32 %v376, %v1175
        %v1177 = vpop.f32.mrb[0].mxu0
        %v1178 = vadd.f32 %v372, %v1177
        %v1179 = vpop.f32.mrb[0].mxu0
        %v1180 = vadd.f32 %v376, %v1179
        %1181 = vmatprep.mubr.bf16.mxu0 %v252
        %1182 = vmatmul.mubr.bf16.gmra.mrb[0].mxu0 %v251
        %v1183 = vpop.f32.mrb[0].mxu0
        %v1184 = vadd.f32 %v372, %v1183
        %v1185 = vpop.f32.mrb[0].mxu0
        %v1186 = vadd.f32 %v376, %v1185
        %v1187 = vpop.f32.mrb[0].mxu0
        %v1188 = vadd.f32 %v372, %v1187
        %v1189 = vpop.f32.mrb[0].mxu0
        %v1190 = vadd.f32 %v376, %v1189
        %1191 = vmatprep.mubr.bf16.mxu0 %v254
        %1192 = vmatmul.mubr.bf16.gmra.mrb[0].mxu0 %v253
        %v1193 = vpop.f32.mrb[0].mxu0
        %v1194 = vadd.f32 %v372, %v1193
        %v1195 = vpop.f32.mrb[0].mxu0
        %v1196 = vadd.f32 %v376, %v1195
        %v1197 = vpop.f32.mrb[0].mxu0
        %v1198 = vadd.f32 %v372, %v1197
        %v1199 = vpop.f32.mrb[0].mxu0
        %v1200 = vadd.f32 %v376, %v1199
        %1201 = vdwg.mxu0
        %v1202 = vpack.c.bf16 %v902, %v898
        %v1203 = vpack.c.bf16 %v904, %v900
        %v1204 = vpack.c.bf16 %v1015, %v1011
        %v1205 = vpack.c.bf16 %v1017, %v1013
        %v1206 = vpack.c.bf16 %v1128, %v1124
        %v1207 = vpack.c.bf16 %v1130, %v1126
        %v1208 = vpack.c.bf16 %v912, %v908
        %v1209 = vpack.c.bf16 %v914, %v910
        %v1210 = vpack.c.bf16 %v1025, %v1021
        %v1211 = vpack.c.bf16 %v1027, %v1023
        %v1212 = vpack.c.bf16 %v1138, %v1134
        %v1213 = vpack.c.bf16 %v1140, %v1136
        %v1214 = vpack.c.bf16 %v922, %v918
        %v1215 = vpack.c.bf16 %v924, %v920
        %v1216 = vpack.c.bf16 %v1035, %v1031
        %v1217 = vpack.c.bf16 %v1037, %v1033
        %v1218 = vpack.c.bf16 %v1148, %v1144
        %v1219 = vpack.c.bf16 %v1150, %v1146
        %v1220 = vpack.c.bf16 %v932, %v928
        %v1221 = vpack.c.bf16 %v934, %v930
        %v1222 = vpack.c.bf16 %v1045, %v1041
        %v1223 = vpack.c.bf16 %v1047, %v1043
        %v1224 = vpack.c.bf16 %v1158, %v1154
        %v1225 = vpack.c.bf16 %v1160, %v1156
        %v1226 = vpack.c.bf16 %v942, %v938
        %v1227 = vpack.c.bf16 %v944, %v940
        %v1228 = vpack.c.bf16 %v1055, %v1051
        %v1229 = vpack.c.bf16 %v1057, %v1053
        %v1230 = vpack.c.bf16 %v1168, %v1164
        %v1231 = vpack.c.bf16 %v1170, %v1166
        %v1232 = vpack.c.bf16 %v952, %v948
        %v1233 = vpack.c.bf16 %v954, %v950
        %v1234 = vpack.c.bf16 %v1065, %v1061
        %v1235 = vpack.c.bf16 %v1067, %v1063
        %v1236 = vpack.c.bf16 %v1178, %v1174
        %v1237 = vpack.c.bf16 %v1180, %v1176
        %v1238 = vpack.c.bf16 %v962, %v958
        %v1239 = vpack.c.bf16 %v964, %v960
        %v1240 = vpack.c.bf16 %v1075, %v1071
        %v1241 = vpack.c.bf16 %v1077, %v1073
        %v1242 = vpack.c.bf16 %v1188, %v1184
        %v1243 = vpack.c.bf16 %v1190, %v1186
        %v1244 = vpack.c.bf16 %v972, %v968
        %v1245 = vpack.c.bf16 %v974, %v970
        %v1246 = vpack.c.bf16 %v1085, %v1081
        %v1247 = vpack.c.bf16 %v1087, %v1083
        %v1248 = vpack.c.bf16 %v1198, %v1194
        %v1249 = vpack.c.bf16 %v1200, %v1196
        %v1298 = vunpack.c.l.b16 %v1202
        %v1299 = vunpack.c.l.b16 %v1203
        %v1300 = vunpack.c.l.b16 %v1204
        %v1301 = vunpack.c.l.b16 %v1205
        %v1302 = vunpack.c.l.b16 %v1206
        %v1303 = vunpack.c.l.b16 %v1207
        %v1304 = vunpack.c.h.b16 %v1202
        %v1305 = vunpack.c.h.b16 %v1203
        %v1306 = vunpack.c.h.b16 %v1204
        %v1307 = vunpack.c.h.b16 %v1205
        %v1308 = vunpack.c.h.b16 %v1206
        %v1309 = vunpack.c.h.b16 %v1207
        %v1310 = vunpack.c.l.b16 %v1208
        %v1311 = vunpack.c.l.b16 %v1209
        %v1312 = vunpack.c.l.b16 %v1210
        %v1313 = vunpack.c.l.b16 %v1211
        %v1314 = vunpack.c.l.b16 %v1212
        %v1315 = vunpack.c.l.b16 %v1213
        %v1316 = vunpack.c.h.b16 %v1208
        %v1317 = vunpack.c.h.b16 %v1209
        %v1318 = vunpack.c.h.b16 %v1210
        %v1319 = vunpack.c.h.b16 %v1211
        %v1320 = vunpack.c.h.b16 %v1212
        %v1321 = vunpack.c.h.b16 %v1213
        %v1322 = vunpack.c.l.b16 %v1214
        %v1323 = vunpack.c.l.b16 %v1215
        %v1324 = vunpack.c.l.b16 %v1216
        %v1325 = vunpack.c.l.b16 %v1217
        %v1326 = vunpack.c.l.b16 %v1218
        %v1327 = vunpack.c.l.b16 %v1219
        %v1328 = vunpack.c.h.b16 %v1214
        %v1329 = vunpack.c.h.b16 %v1215
        %v1330 = vunpack.c.h.b16 %v1216
        %v1331 = vunpack.c.h.b16 %v1217
        %v1332 = vunpack.c.h.b16 %v1218
        %v1333 = vunpack.c.h.b16 %v1219
        %v1334 = vunpack.c.l.b16 %v1220
        %v1335 = vunpack.c.l.b16 %v1221
        %v1336 = vunpack.c.l.b16 %v1222
        %v1337 = vunpack.c.l.b16 %v1223
        %v1338 = vunpack.c.l.b16 %v1224
        %v1339 = vunpack.c.l.b16 %v1225
        %v1340 = vunpack.c.h.b16 %v1220
        %v1341 = vunpack.c.h.b16 %v1221
        %v1342 = vunpack.c.h.b16 %v1222
        %v1343 = vunpack.c.h.b16 %v1223
        %v1344 = vunpack.c.h.b16 %v1224
        %v1345 = vunpack.c.h.b16 %v1225
        %v1346 = vunpack.c.l.b16 %v1226
        %v1347 = vunpack.c.l.b16 %v1227
        %v1348 = vunpack.c.l.b16 %v1228
        %v1349 = vunpack.c.l.b16 %v1229
        %v1350 = vunpack.c.l.b16 %v1230
        %v1351 = vunpack.c.l.b16 %v1231
        %v1352 = vunpack.c.h.b16 %v1226
        %v1353 = vunpack.c.h.b16 %v1227
        %v1354 = vunpack.c.h.b16 %v1228
        %v1355 = vunpack.c.h.b16 %v1229
        %v1356 = vunpack.c.h.b16 %v1230
        %v1357 = vunpack.c.h.b16 %v1231
        %v1358 = vunpack.c.l.b16 %v1232
        %v1359 = vunpack.c.l.b16 %v1233
        %v1360 = vunpack.c.l.b16 %v1234
        %v1361 = vunpack.c.l.b16 %v1235
        %v1362 = vunpack.c.l.b16 %v1236
        %v1363 = vunpack.c.l.b16 %v1237
        %v1364 = vunpack.c.h.b16 %v1232
        %v1365 = vunpack.c.h.b16 %v1233
        %v1366 = vunpack.c.h.b16 %v1234
        %v1367 = vunpack.c.h.b16 %v1235
        %v1368 = vunpack.c.h.b16 %v1236
        %v1369 = vunpack.c.h.b16 %v1237
        %v1370 = vunpack.c.l.b16 %v1238
        %v1371 = vunpack.c.l.b16 %v1239
        %v1372 = vunpack.c.l.b16 %v1240
        %v1373 = vunpack.c.l.b16 %v1241
        %v1374 = vunpack.c.l.b16 %v1242
        %v1375 = vunpack.c.l.b16 %v1243
        %v1376 = vunpack.c.h.b16 %v1238
        %v1377 = vunpack.c.h.b16 %v1239
        %v1378 = vunpack.c.h.b16 %v1240
        %v1379 = vunpack.c.h.b16 %v1241
        %v1380 = vunpack.c.h.b16 %v1242
        %v1381 = vunpack.c.h.b16 %v1243
        %v1382 = vunpack.c.l.b16 %v1244
        %v1383 = vunpack.c.l.b16 %v1245
        %v1384 = vunpack.c.l.b16 %v1246
        %v1385 = vunpack.c.l.b16 %v1247
        %v1386 = vunpack.c.l.b16 %v1248
        %v1387 = vunpack.c.l.b16 %v1249
        %v1388 = vunpack.c.h.b16 %v1244
        %v1389 = vunpack.c.h.b16 %v1245
        %v1390 = vunpack.c.h.b16 %v1246
        %v1391 = vunpack.c.h.b16 %v1247
        %v1392 = vunpack.c.h.b16 %v1248
        %v1393 = vunpack.c.h.b16 %v1249
        %v1394 = vpack.c.b16 %v1299, %v1298
        %v1395 = vpack.c.b16 %v1301, %v1300
        %v1396 = vpack.c.b16 %v1303, %v1302
        %v1397 = vpack.c.b16 %v1305, %v1304
        %v1398 = vpack.c.b16 %v1307, %v1306
        %v1399 = vpack.c.b16 %v1309, %v1308
        %v1400 = vpack.c.b16 %v1311, %v1310
        %v1401 = vpack.c.b16 %v1313, %v1312
        %v1402 = vpack.c.b16 %v1315, %v1314
        %v1403 = vpack.c.b16 %v1317, %v1316
        %v1404 = vpack.c.b16 %v1319, %v1318
        %v1405 = vpack.c.b16 %v1321, %v1320
        %v1406 = vpack.c.b16 %v1323, %v1322
        %v1407 = vpack.c.b16 %v1325, %v1324
        %v1408 = vpack.c.b16 %v1327, %v1326
        %v1409 = vpack.c.b16 %v1329, %v1328
        %v1410 = vpack.c.b16 %v1331, %v1330
        %v1411 = vpack.c.b16 %v1333, %v1332
        %v1412 = vpack.c.b16 %v1335, %v1334
        %v1413 = vpack.c.b16 %v1337, %v1336
        %v1414 = vpack.c.b16 %v1339, %v1338
        %v1415 = vpack.c.b16 %v1341, %v1340
        %v1416 = vpack.c.b16 %v1343, %v1342
        %v1417 = vpack.c.b16 %v1345, %v1344
        %v1418 = vpack.c.b16 %v1347, %v1346
        %v1419 = vpack.c.b16 %v1349, %v1348
        %v1420 = vpack.c.b16 %v1351, %v1350
        %v1421 = vpack.c.b16 %v1353, %v1352
        %v1422 = vpack.c.b16 %v1355, %v1354
        %v1423 = vpack.c.b16 %v1357, %v1356
        %v1424 = vpack.c.b16 %v1359, %v1358
        %v1425 = vpack.c.b16 %v1361, %v1360
        %v1426 = vpack.c.b16 %v1363, %v1362
        %v1427 = vpack.c.b16 %v1365, %v1364
        %v1428 = vpack.c.b16 %v1367, %v1366
        %v1429 = vpack.c.b16 %v1369, %v1368
        %v1430 = vpack.c.b16 %v1371, %v1370
        %v1431 = vpack.c.b16 %v1373, %v1372
        %v1432 = vpack.c.b16 %v1375, %v1374
        %v1433 = vpack.c.b16 %v1377, %v1376
        %v1434 = vpack.c.b16 %v1379, %v1378
        %v1435 = vpack.c.b16 %v1381, %v1380
        %v1436 = vpack.c.b16 %v1383, %v1382
        %v1437 = vpack.c.b16 %v1385, %v1384
        %v1438 = vpack.c.b16 %v1387, %v1386
        %v1439 = vpack.c.b16 %v1389, %v1388
        %v1440 = vpack.c.b16 %v1391, %v1390
        %v1441 = vpack.c.b16 %v1393, %v1392
        %1490 = vst [vmem:[%s204] sm:$0xff] %v1394
        %1491 = vst [vmem:[%s204 + $0x8] sm:$0xff] %v1395
        %1492 = vst [vmem:[%s204 + $0x10] sm:$0xff] %v1396
        %1493 = vst [vmem:[%s204 + $0x18] sm:$0xff] %v1397
        %1494 = vst [vmem:[%s204 + $0x20] sm:$0xff] %v1398
        %1495 = vst [vmem:[%s204 + $0x28] sm:$0xff] %v1399
        %1496 = vst [vmem:[%s204 + $0x30] sm:$0xff] %v1400
        %1497 = vst [vmem:[%s204 + $0x38] sm:$0xff] %v1401
        %1498 = vst [vmem:[%s204 + $0x40] sm:$0xff] %v1402
        %1499 = vst [vmem:[%s204 + $0x48] sm:$0xff] %v1403
        %1500 = vst [vmem:[%s204 + $0x50] sm:$0xff] %v1404
        %1501 = vst [vmem:[%s204 + $0x58] sm:$0xff] %v1405
        %1502 = vst [vmem:[%s204 + $0x60] sm:$0xff] %v1406
        %1503 = vst [vmem:[%s204 + $0x68] sm:$0xff] %v1407
        %1504 = vst [vmem:[%s204 + $0x70] sm:$0xff] %v1408
        %1505 = vst [vmem:[%s204 + $0x78] sm:$0xff] %v1409
        %1506 = vst [vmem:[%s204 + $0x80] sm:$0xff] %v1410
        %1507 = vst [vmem:[%s204 + $0x88] sm:$0xff] %v1411
        %1508 = vst [vmem:[%s204 + $0x90] sm:$0xff] %v1412
        %1509 = vst [vmem:[%s204 + $0x98] sm:$0xff] %v1413
        %1510 = vst [vmem:[%s204 + $0xa0] sm:$0xff] %v1414
        %1511 = vst [vmem:[%s204 + $0xa8] sm:$0xff] %v1415
        %1512 = vst [vmem:[%s204 + $0xb0] sm:$0xff] %v1416
        %1513 = vst [vmem:[%s204 + $0xb8] sm:$0xff] %v1417
        %1514 = vst [vmem:[%s204 + $0xc0] sm:$0xff] %v1418
        %1515 = vst [vmem:[%s204 + $0xc8] sm:$0xff] %v1419
        %1516 = vst [vmem:[%s204 + $0xd0] sm:$0xff] %v1420
        %1517 = vst [vmem:[%s204 + $0xd8] sm:$0xff] %v1421
        %1518 = vst [vmem:[%s204 + $0xe0] sm:$0xff] %v1422
        %1519 = vst [vmem:[%s204 + $0xe8] sm:$0xff] %v1423
        %1520 = vst [vmem:[%s204 + $0xf0] sm:$0xff] %v1424
        %1521 = vst [vmem:[%s204 + $0xf8] sm:$0xff] %v1425
        %1522 = vst [vmem:[%s204 + $0x100] sm:$0xff] %v1426
        %1523 = vst [vmem:[%s204 + $0x108] sm:$0xff] %v1427
        %1524 = vst [vmem:[%s204 + $0x110] sm:$0xff] %v1428
        %1525 = vst [vmem:[%s204 + $0x118] sm:$0xff] %v1429
        %1526 = vst [vmem:[%s204 + $0x120] sm:$0xff] %v1430
        %1527 = vst [vmem:[%s204 + $0x128] sm:$0xff] %v1431
        %1528 = vst [vmem:[%s204 + $0x130] sm:$0xff] %v1432
        %1529 = vst [vmem:[%s204 + $0x138] sm:$0xff] %v1433
        %1530 = vst [vmem:[%s204 + $0x140] sm:$0xff] %v1434
        %1531 = vst [vmem:[%s204 + $0x148] sm:$0xff] %v1435
        %1532 = vst [vmem:[%s204 + $0x150] sm:$0xff] %v1436
        %1533 = vst [vmem:[%s204 + $0x158] sm:$0xff] %v1437
        %1534 = vst [vmem:[%s204 + $0x160] sm:$0xff] %v1438
        %1535 = vst [vmem:[%s204 + $0x168] sm:$0xff] %v1439
        %1536 = vst [vmem:[%s204 + $0x170] sm:$0xff] %v1440
        %1537 = vst [vmem:[%s204 + $0x178] sm:$0xff] %v1441
        %s1538 = sand.u32 %s97, 1
        %s1539 = scalar_lea.sflag [#allocation4], %s1538
        %s1540 = sand.u32 %s97, 1
        %s1541 = smul.addr %s1540, 384
        %s1542 = scalar_lea.vmem [#allocation7], %s1541
        // Predicated region
        $region41: #{tpu_custom_call.1} parent=31 // pred_check
          %p1543 = pneg %p107
        $region42: #{tpu_custom_call.1} parent=31 // pred_check_branch
          %1545 = sbr.rel (%p1543) target = $region44
        $region43: #{tpu_custom_call.1} parent=31 // pred_region
          %s1546 = smul.u32 16, %s21
          %s1548 = ssub.s32 6144, 6144
          %1549 = vsyncadd %s1539, %s1548
          %s1550 = smul.addr %s1546, 6
          %s1551 = smul.addr %s1550, 64
          %s1552 = scalar_lea.hbm %s3, %s1551
          %s1553 = sshll.u32 %s1542, 4
          %s1554 = int_to_ptr.vmem [resolvable:$true] %s1553
          %1559 = dma.vmem_to_hbm [thread:$0]  %s1554, 6144, %s1552, %s1539, 384, 384, 24
        $region44: #{tpu_custom_call.1} parent=31 // pred_fallthru
          _
      $region32: #{tpu_custom_call.1} parent=5 // pred_fallthru
        _
      %p1560 = scmp.le.s32.totalorder 2, %s16
      // Predicated region
      $region45: #{tpu_custom_call.1} parent=5 // pred_check
        %p1561 = pneg %p1560
      $region46: #{tpu_custom_call.1} parent=5 // pred_check_branch
        %1563 = sbr.rel (%p1561) target = $region48
      $region47: #{tpu_custom_call.1} parent=5 // pred_region
        %s1564 = ssub.s32 %s16, 2
        // Predicated region
        $region49: #{tpu_custom_call.1} parent=47 // pred_check
          %p1565 = pneg %p113
        $region50: #{tpu_custom_call.1} parent=47 // pred_check_branch
          %1567 = sbr.rel (%p1565) target = $region52
        $region51: #{tpu_custom_call.1} parent=47 // pred_region
          %s1568 = sand.u32 %s98, 1
          %s1569 = scalar_lea.sflag [#allocation4], %s1568
          %s1570 = sand.u32 %s98, 1
          %s1571 = smul.addr %s1570, 384
          %s1572 = scalar_lea.vmem [#allocation7], %s1571
          %1573 = dma.done %s1569, 6144
        $region52: #{tpu_custom_call.1} parent=47 // pred_fallthru
          _
      $region48: #{tpu_custom_call.1} parent=5 // pred_fallthru
        _
    $region6: #{tpu_custom_call.1} parent=1 // loop_footer
      %s20 = sadd.s32 1, %s16
    $region7: #{tpu_custom_call.1} parent=1 // loop_footer_branch
      %15 = sbr.rel target = $region3
    $region8: #{tpu_custom_call.1} parent=1 // loop_exit
      _
    %1574 = vsyncpa [#allocation3], 1
    %s1575 = scalar_lea.sflag [#allocation3], 1
    %1576 = vsyncpa %s1575, 1
    %1577 = vsyncpa [#allocation6], 1
    %1578 = vsyncpa [#allocation4], 1
    %s1579 = scalar_lea.sflag [#allocation4], 1
    %1580 = vsyncpa %s1579, 1

</llo_original>
